<compile_context>
chip_gen: v6e
topology: v6e:2x2x1
jax: 0.10.0
libtpu: 0.0.40
codegen_flags: <defaults>
</compile_context>

<pallas_src>
import functools

import jax
import jax.numpy as jnp
from jax.experimental import pallas as pl
from jax.experimental.pallas import tpu as pltpu

_LANE = 128     # last block dim should be a multiple of this
_SUBLANE = 8    # f32 sublane requirement for the second-to-last block dim


def _round_up(x, m):
    return (x + m - 1) // m * m


def _sigmoid(x):
    # exp on the EUP + approx reciprocal on the EUP; keeps the divide off the VPU.
    return pl.reciprocal(1.0 + jnp.exp(-x), approx=True)


def _autoencoder_kernel(x_ref, w_in_ref, b_in_ref, w_out_ref, b_out_ref,
                        out_ref, hidden_ref):
    # Encoder: hidden = sigmoid(x @ W_in + b_in); f32 accumulation on the MXU.
    pre_h = jnp.dot(x_ref[...], w_in_ref[...], preferred_element_type=jnp.float32)
    pre_h = pre_h + b_in_ref[...]                       # (1, H) broadcasts over rows
    hidden = _sigmoid(pre_h)                            # f32
    hidden_ref[...] = hidden.astype(hidden_ref.dtype)

    # Decoder: out = sigmoid(hidden @ W_out + b_out).  Cast hidden to the weight
    # dtype (bf16 in bf16 mode) so the MXU runs a single-pass matmul.
    pre_o = jnp.dot(hidden.astype(w_out_ref.dtype), w_out_ref[...],
                    preferred_element_type=jnp.float32)
    pre_o = pre_o + b_out_ref[...]
    out_ref[...] = _sigmoid(pre_o).astype(out_ref.dtype)


def _weight_spec(shape, pipeline_mode):
    if pipeline_mode is None:
        return pl.BlockSpec(shape, lambda i: (0, 0))
    return pl.BlockSpec(shape, lambda i: (0, 0), pipeline_mode=pipeline_mode)


@functools.partial(
    jax.jit,
    static_argnames=("block_batch", "compute_dtype", "single_buffer_weights"))
def _autoencoder_forward_impl(x, w_in_t, b_in, w_out_t, b_out, *,
                              block_batch, compute_dtype, single_buffer_weights):
    B, input_size = x.shape
    hidden_size = w_in_t.shape[1]
    out_dtype = x.dtype

    # Lane-dense feature dims + padded (ragged-safe) batch.
    ipad = _round_up(input_size, _LANE)
    hpad = _round_up(hidden_size, _LANE)
    bpad = _round_up(B, block_batch)

    xp = jnp.zeros((bpad, ipad), compute_dtype)
    xp = xp.at[:B, :input_size].set(x.astype(compute_dtype))
    w_in_p = jnp.zeros((ipad, hpad), compute_dtype)
    w_in_p = w_in_p.at[:input_size, :hidden_size].set(w_in_t.astype(compute_dtype))
    b_in_p = jnp.zeros((1, hpad), jnp.float32)
    b_in_p = b_in_p.at[:, :hidden_size].set(b_in.reshape(1, -1).astype(jnp.float32))
    w_out_p = jnp.zeros((hpad, ipad), compute_dtype)
    w_out_p = w_out_p.at[:hidden_size, :input_size].set(w_out_t.astype(compute_dtype))
    b_out_p = jnp.zeros((1, ipad), jnp.float32)
    b_out_p = b_out_p.at[:, :input_size].set(b_out.reshape(1, -1).astype(jnp.float32))

    grid = (bpad // block_batch,)

    # Single-buffer the constant-index weights/biases (their block never changes).
    weight_mode = pl.Buffered(buffer_count=1) if single_buffer_weights else None
    weight_buffers = 1 if single_buffer_weights else 2

    # VMEM budget from the actual footprint, capped at 64 MiB for v7x.
    cbytes = jnp.dtype(compute_dtype).itemsize
    obytes = jnp.dtype(out_dtype).itemsize
    est = (2 * block_batch * ipad * cbytes            # x tile (double buffered)
           + 2 * block_batch * ipad * obytes          # out tile
           + 2 * block_batch * hpad * obytes          # hidden tile
           + weight_buffers * 2 * ipad * hpad * cbytes  # W_in + W_out
           + weight_buffers * 4 * (ipad + hpad))        # biases (f32)
    vmem_limit = int(min(64 * 2**20, max(32 * 2**20, 1.25 * est)))

    out_p, hidden_p = pl.pallas_call(
        _autoencoder_kernel,
        out_shape=(
            jax.ShapeDtypeStruct((bpad, ipad), out_dtype),
            jax.ShapeDtypeStruct((bpad, hpad), out_dtype),
        ),
        grid_spec=pltpu.PrefetchScalarGridSpec(
            num_scalar_prefetch=0,
            grid=grid,
            in_specs=[
                pl.BlockSpec((block_batch, ipad), lambda i: (i, 0)),  # x: batch-tiled
                _weight_spec((ipad, hpad), weight_mode),              # W_in
                _weight_spec((1, hpad), weight_mode),                 # b_in
                _weight_spec((hpad, ipad), weight_mode),              # W_out
                _weight_spec((1, ipad), weight_mode),                 # b_out
            ],
            out_specs=[
                pl.BlockSpec((block_batch, ipad), lambda i: (i, 0)),
                pl.BlockSpec((block_batch, hpad), lambda i: (i, 0)),
            ],
        ),
        compiler_params=pltpu.CompilerParams(
            dimension_semantics=("parallel",),   # batch tiles split across v7x's 2 TCs
            vmem_limit_bytes=vmem_limit,
        ),
    )(xp, w_in_p, b_in_p, w_out_p, b_out_p)

    # TODO(synk): for very large feature dims (weights >~24 MiB in bf16) add a K/N
    # tiling grid axis with an f32 VMEM accumulator instead of keeping the full
    # weights resident (add the bias only on the last K step under pl.when).
    return out_p[:B, :input_size], hidden_p[:B, :hidden_size]


def autoencoder_forward(x, w_in_t, b_in, w_out_t, b_out, *,
                        block_batch=None, compute_dtype=None):
    """Pallas forward matching PyTorch AutoEncoder.forward.

    x       : [B, input_size]
    w_in_t  : [input_size, hidden]   (fc_in.weight.T)
    b_in    : [hidden] or [1, hidden]
    w_out_t : [hidden, input_size]   (fc_out.weight.T)
    b_out   : [input_size] or [1, input_size]
    compute_dtype: matmul-operand dtype (jnp.bfloat16 halves HBM traffic on
      v6e/v7x); accumulation & activations stay f32, outputs keep x.dtype.
    Returns (sigmoid(out), hidden) like the PyTorch module.
    """
    B = x.shape[0]
    if compute_dtype is None:
        compute_dtype = x.dtype
    compute_dtype = jnp.dtype(compute_dtype)

    if block_batch is None:
        block_batch = 512 if compute_dtype == jnp.dtype(jnp.bfloat16) else 256
    block_batch = int(min(block_batch, _round_up(B, _SUBLANE)))
    block_batch = max(_SUBLANE, _round_up(block_batch, _SUBLANE))

    kwargs = dict(block_batch=block_batch, compute_dtype=compute_dtype)
    try:
        return _autoencoder_forward_impl(x, w_in_t, b_in, w_out_t, b_out,
                                         single_buffer_weights=True, **kwargs)
    except Exception:
        # Fallback if this jax/libtpu build rejects pl.Buffered(1) on an input
        # spec; semantics identical, weights are just double-buffered.
        return _autoencoder_forward_impl(x, w_in_t, b_in, w_out_t, b_out,
                                         single_buffer_weights=False, **kwargs)


def init_params(key, input_size, hidden_size):
    """Deterministic init mimicking nn.Linear's U(-1/sqrt(fan_in), 1/sqrt(fan_in))."""
    k1, k2, k3, k4 = jax.random.split(key, 4)
    bnd_in = 1.0 / jnp.sqrt(input_size)
    bnd_h = 1.0 / jnp.sqrt(hidden_size)
    # Stored pre-transposed: [in_features, out_features]
    w_in_t = jax.random.uniform(k1, (input_size, hidden_size), jnp.float32,
                                -bnd_in, bnd_in)
    b_in = jax.random.uniform(k2, (1, hidden_size), jnp.float32, -bnd_in, bnd_in)
    w_out_t = jax.random.uniform(k3, (hidden_size, input_size), jnp.float32,
                                 -bnd_h, bnd_h)
    b_out = jax.random.uniform(k4, (1, input_size), jnp.float32, -bnd_h, bnd_h)
    return w_in_t, b_in, w_out_t, b_out


def reference_forward(x, w_in_t, b_in, w_out_t, b_out, compute_dtype=None):
    if compute_dtype is not None:
        x = x.astype(compute_dtype)
        w_in_t = w_in_t.astype(compute_dtype)
        w_out_t = w_out_t.astype(compute_dtype)
    pre_h = jnp.dot(x, w_in_t, preferred_element_type=jnp.float32) + b_in.reshape(1, -1)
    hidden = jax.nn.sigmoid(pre_h)
    pre_o = (jnp.dot(hidden.astype(w_out_t.dtype), w_out_t,
                     preferred_element_type=jnp.float32) + b_out.reshape(1, -1))
    return jax.nn.sigmoid(pre_o), hidden


if __name__ == "__main__":
    # Deliberately ragged batch and sub-128 feature dims to exercise the padding paths.
    batch, input_size, hidden_size = 300, 100, 40

    key = jax.random.PRNGKey(0)
    kx, kp = jax.random.split(key)
    x = jax.random.normal(kx, (batch, input_size), jnp.float32)
    params = init_params(kp, input_size, hidden_size)

    # f32 operands; block_batch=128 -> grid of 3 steps (pipelined, megacore-splittable).
    out, hidden = autoencoder_forward(x, *params, block_batch=128)
    out, hidden = jax.block_until_ready((out, hidden))
    out_ref, hidden_ref = reference_forward(x, *params)
    assert out.shape == (batch, input_size)
    assert hidden.shape == (batch, hidden_size)
    # Tolerance covers the EUP approx reciprocal in sigmoid and MXU f32 pass decomposition.
    assert float(jnp.max(jnp.abs(out - out_ref))) < 1e-2, "f32 output mismatch"
    assert float(jnp.max(jnp.abs(hidden - hidden_ref))) < 1e-2, "f32 hidden mismatch"

    # bf16 operands (halved HBM traffic, f32 accumulation); looser tolerance.
    out_bf, hidden_bf = autoencoder_forward(x, *params, block_batch=128,
                                            compute_dtype=jnp.bfloat16)
    out_bf, hidden_bf = jax.block_until_ready((out_bf, hidden_bf))
    out_bref, hidden_bref = reference_forward(x, *params, compute_dtype=jnp.bfloat16)
    assert float(jnp.max(jnp.abs(out_bf - out_bref))) < 3e-2, "bf16 output mismatch"
    assert float(jnp.max(jnp.abs(hidden_bf - hidden_bref))) < 3e-2, "bf16 hidden mismatch"

    print("KERNEL_OK")
</pallas_src>

<mosaic_0001>
module attributes {stable_mosaic.version = 11 : i64} {
  func.func @_autoencoder_kernel(%arg0: i32, %arg1: memref<128x128xf32, #tpu.memory_space<vmem>>, %arg2: memref<128x128xf32, #tpu.memory_space<vmem>>, %arg3: memref<1x128xf32, #tpu.memory_space<vmem>>, %arg4: memref<128x128xf32, #tpu.memory_space<vmem>>, %arg5: memref<1x128xf32, #tpu.memory_space<vmem>>, %arg6: memref<128x128xf32, #tpu.memory_space<vmem>>, %arg7: memref<128x128xf32, #tpu.memory_space<vmem>>) attributes {dimension_semantics = [#tpu.dimension_semantics<parallel>], iteration_bounds = array<i64: 3>, scalar_prefetch = 0 : i64, scratch_operands = 0 : i64, tpu.core_type = #tpu.core_type<tc>, window_params = [{transform_indices = @transform_0, window_bounds = array<i64: 128, 128>}, {pipeline_mode = #tpu.pipeline_mode<synchronous>, transform_indices = @transform_1, window_bounds = array<i64: 128, 128>}, {pipeline_mode = #tpu.pipeline_mode<synchronous>, transform_indices = @transform_2, window_bounds = array<i64: 1, 128>}, {pipeline_mode = #tpu.pipeline_mode<synchronous>, transform_indices = @transform_3, window_bounds = array<i64: 128, 128>}, {pipeline_mode = #tpu.pipeline_mode<synchronous>, transform_indices = @transform_4, window_bounds = array<i64: 1, 128>}, {transform_indices = @transform_5, window_bounds = array<i64: 128, 128>}, {transform_indices = @transform_6, window_bounds = array<i64: 128, 128>}]} {
    %c0 = arith.constant 0 : index
    %c0_0 = arith.constant 0 : index
    %0 = vector.load %arg1[%c0, %c0_0] : memref<128x128xf32, #tpu.memory_space<vmem>>, vector<128x128xf32>
    %c0_1 = arith.constant 0 : index
    %c0_2 = arith.constant 0 : index
    %1 = vector.load %arg2[%c0_1, %c0_2] : memref<128x128xf32, #tpu.memory_space<vmem>>, vector<128x128xf32>
    %cst = arith.constant dense<0.000000e+00> : vector<128x128xf32>
    %2 = tpu.matmul %0, %1, %cst {dimension_numbers = #tpu.dot_dimension_numbers<[1], [0], [0], [1], [0, 0, 1, 1], [], []>} : vector<128x128xf32>, vector<128x128xf32>, vector<128x128xf32> -> vector<128x128xf32>
    %c0_3 = arith.constant 0 : index
    %c0_4 = arith.constant 0 : index
    %3 = vector.load %arg3[%c0_3, %c0_4] : memref<1x128xf32, #tpu.memory_space<vmem>>, vector<1x128xf32>
    %4 = vector.broadcast %3 : vector<1x128xf32> to vector<128x128xf32>
    %5 = arith.addf %2, %4 : vector<128x128xf32>
    %cst_5 = arith.constant 0.000000e+00 : f32
    %6 = vector.broadcast %cst_5 : f32 to vector<128x128xf32>
    %7 = arith.subf %6, %5 : vector<128x128xf32>
    %8 = math.exp %7 : vector<128x128xf32>
    %cst_6 = arith.constant 1.000000e+00 : f32
    %9 = vector.broadcast %cst_6 : f32 to vector<128x128xf32>
    %10 = arith.addf %9, %8 : vector<128x128xf32>
    %11 = tpu.reciprocal %10 {approx = true} : vector<128x128xf32> -> vector<128x128xf32>
    %c0_7 = arith.constant 0 : index
    %c0_8 = arith.constant 0 : index
    %12 = vector.load %arg7[%c0_7, %c0_8] : memref<128x128xf32, #tpu.memory_space<vmem>>, vector<128x128xf32>
    tpu.vector_store %arg7[%c0_7, %c0_8], %11 {strides = array<i32>} : memref<128x128xf32, #tpu.memory_space<vmem>>, vector<128x128xf32>,
    %c0_9 = arith.constant 0 : index
    %c0_10 = arith.constant 0 : index
    %13 = vector.load %arg4[%c0_9, %c0_10] : memref<128x128xf32, #tpu.memory_space<vmem>>, vector<128x128xf32>
    %cst_11 = arith.constant dense<0.000000e+00> : vector<128x128xf32>
    %14 = tpu.matmul %11, %13, %cst_11 {dimension_numbers = #tpu.dot_dimension_numbers<[1], [0], [0], [1], [0, 0, 1, 1], [], []>} : vector<128x128xf32>, vector<128x128xf32>, vector<128x128xf32> -> vector<128x128xf32>
    %c0_12 = arith.constant 0 : index
    %c0_13 = arith.constant 0 : index
    %15 = vector.load %arg5[%c0_12, %c0_13] : memref<1x128xf32, #tpu.memory_space<vmem>>, vector<1x128xf32>
    %16 = vector.broadcast %15 : vector<1x128xf32> to vector<128x128xf32>
    %17 = arith.addf %14, %16 : vector<128x128xf32>
    %cst_14 = arith.constant 0.000000e+00 : f32
    %18 = vector.broadcast %cst_14 : f32 to vector<128x128xf32>
    %19 = arith.subf %18, %17 : vector<128x128xf32>
    %20 = math.exp %19 : vector<128x128xf32>
    %cst_15 = arith.constant 1.000000e+00 : f32
    %21 = vector.broadcast %cst_15 : f32 to vector<128x128xf32>
    %22 = arith.addf %21, %20 : vector<128x128xf32>
    %23 = tpu.reciprocal %22 {approx = true} : vector<128x128xf32> -> vector<128x128xf32>
    %c0_16 = arith.constant 0 : index
    %c0_17 = arith.constant 0 : index
    %24 = vector.load %arg6[%c0_16, %c0_17] : memref<128x128xf32, #tpu.memory_space<vmem>>, vector<128x128xf32>
    tpu.vector_store %arg6[%c0_16, %c0_17], %23 {strides = array<i32>} : memref<128x128xf32, #tpu.memory_space<vmem>>, vector<128x128xf32>,
    return
  }
  func.func @transform_0(%arg0: i32) -> (i32, i32) {
    %c0_i32 = arith.constant 0 : i32
    %c0_i32_0 = arith.constant 0 : i32
    return %arg0, %c0_i32 : i32, i32
  }
  func.func @transform_1(%arg0: i32) -> (i32, i32) {
    %c0_i32 = arith.constant 0 : i32
    %c0_i32_0 = arith.constant 0 : i32
    %c0_i32_1 = arith.constant 0 : i32
    return %c0_i32, %c0_i32_0 : i32, i32
  }
  func.func @transform_2(%arg0: i32) -> (i32, i32) {
    %c0_i32 = arith.constant 0 : i32
    %c0_i32_0 = arith.constant 0 : i32
    %c0_i32_1 = arith.constant 0 : i32
    return %c0_i32, %c0_i32_0 : i32, i32
  }
  func.func @transform_3(%arg0: i32) -> (i32, i32) {
    %c0_i32 = arith.constant 0 : i32
    %c0_i32_0 = arith.constant 0 : i32
    %c0_i32_1 = arith.constant 0 : i32
    return %c0_i32, %c0_i32_0 : i32, i32
  }
  func.func @transform_4(%arg0: i32) -> (i32, i32) {
    %c0_i32 = arith.constant 0 : i32
    %c0_i32_0 = arith.constant 0 : i32
    %c0_i32_1 = arith.constant 0 : i32
    return %c0_i32, %c0_i32_0 : i32, i32
  }
  func.func @transform_5(%arg0: i32) -> (i32, i32) {
    %c0_i32 = arith.constant 0 : i32
    %c0_i32_0 = arith.constant 0 : i32
    return %arg0, %c0_i32 : i32, i32
  }
  func.func @transform_6(%arg0: i32) -> (i32, i32) {
    %c0_i32 = arith.constant 0 : i32
    %c0_i32_0 = arith.constant 0 : i32
    return %arg0, %c0_i32 : i32, i32
  }
}

module attributes {stable_mosaic.version = 11 : i64} {
  func.func @_autoencoder_kernel(%arg0: i32, %arg1: memref<128x128xf32, #tpu.memory_space<vmem>>, %arg2: memref<128x128xf32, #tpu.memory_space<vmem>>, %arg3: memref<1x128xf32, #tpu.memory_space<vmem>>, %arg4: memref<128x128xf32, #tpu.memory_space<vmem>>, %arg5: memref<1x128xf32, #tpu.memory_space<vmem>>, %arg6: memref<128x128xf32, #tpu.memory_space<vmem>>, %arg7: memref<128x128xf32, #tpu.memory_space<vmem>>) attributes {dimension_semantics = [#tpu.dimension_semantics<parallel>], iteration_bounds = array<i64: 3>, scalar_prefetch = 0 : i64, scratch_operands = 0 : i64, tpu.core_type = #tpu.core_type<tc>, window_params = [{transform_indices = @transform_0, window_bounds = array<i64: 128, 128>}, {pipeline_mode = #tpu.pipeline_mode<synchronous>, transform_indices = @transform_1, window_bounds = array<i64: 128, 128>}, {pipeline_mode = #tpu.pipeline_mode<synchronous>, transform_indices = @transform_2, window_bounds = array<i64: 1, 128>}, {pipeline_mode = #tpu.pipeline_mode<synchronous>, transform_indices = @transform_3, window_bounds = array<i64: 128, 128>}, {pipeline_mode = #tpu.pipeline_mode<synchronous>, transform_indices = @transform_4, window_bounds = array<i64: 1, 128>}, {transform_indices = @transform_5, window_bounds = array<i64: 128, 128>}, {transform_indices = @transform_6, window_bounds = array<i64: 128, 128>}]} {
    %c0 = arith.constant 0 : index
    %c0_0 = arith.constant 0 : index
    %0 = vector.load %arg1[%c0, %c0_0] : memref<128x128xf32, #tpu.memory_space<vmem>>, vector<128x128xf32>
    %c0_1 = arith.constant 0 : index
    %c0_2 = arith.constant 0 : index
    %1 = vector.load %arg2[%c0_1, %c0_2] : memref<128x128xf32, #tpu.memory_space<vmem>>, vector<128x128xf32>
    %cst = arith.constant dense<0.000000e+00> : vector<128x128xf32>
    %2 = tpu.matmul %0, %1, %cst {dimension_numbers = #tpu.dot_dimension_numbers<[1], [0], [0], [1], [0, 0, 1, 1], [], []>} : vector<128x128xf32>, vector<128x128xf32>, vector<128x128xf32> -> vector<128x128xf32>
    %c0_3 = arith.constant 0 : index
    %c0_4 = arith.constant 0 : index
    %3 = vector.load %arg3[%c0_3, %c0_4] : memref<1x128xf32, #tpu.memory_space<vmem>>, vector<1x128xf32>
    %4 = vector.broadcast %3 : vector<1x128xf32> to vector<128x128xf32>
    %5 = arith.addf %2, %4 : vector<128x128xf32>
    %cst_5 = arith.constant 0.000000e+00 : f32
    %6 = vector.broadcast %cst_5 : f32 to vector<128x128xf32>
    %7 = arith.subf %6, %5 : vector<128x128xf32>
    %8 = math.exp %7 : vector<128x128xf32>
    %cst_6 = arith.constant 1.000000e+00 : f32
    %9 = vector.broadcast %cst_6 : f32 to vector<128x128xf32>
    %10 = arith.addf %9, %8 : vector<128x128xf32>
    %11 = tpu.reciprocal %10 {approx = true} : vector<128x128xf32> -> vector<128x128xf32>
    %c0_7 = arith.constant 0 : index
    %c0_8 = arith.constant 0 : index
    %12 = vector.load %arg7[%c0_7, %c0_8] : memref<128x128xf32, #tpu.memory_space<vmem>>, vector<128x128xf32>
    tpu.vector_store %arg7[%c0_7, %c0_8], %11 {strides = array<i32>} : memref<128x128xf32, #tpu.memory_space<vmem>>, vector<128x128xf32>,
    %c0_9 = arith.constant 0 : index
    %c0_10 = arith.constant 0 : index
    %13 = vector.load %arg4[%c0_9, %c0_10] : memref<128x128xf32, #tpu.memory_space<vmem>>, vector<128x128xf32>
    %cst_11 = arith.constant dense<0.000000e+00> : vector<128x128xf32>
    %14 = tpu.matmul %11, %13, %cst_11 {dimension_numbers = #tpu.dot_dimension_numbers<[1], [0], [0], [1], [0, 0, 1, 1], [], []>} : vector<128x128xf32>, vector<128x128xf32>, vector<128x128xf32> -> vector<128x128xf32>
    %c0_12 = arith.constant 0 : index
    %c0_13 = arith.constant 0 : index
    %15 = vector.load %arg5[%c0_12, %c0_13] : memref<1x128xf32, #tpu.memory_space<vmem>>, vector<1x128xf32>
    %16 = vector.broadcast %15 : vector<1x128xf32> to vector<128x128xf32>
    %17 = arith.addf %14, %16 : vector<128x128xf32>
    %cst_14 = arith.constant 0.000000e+00 : f32
    %18 = vector.broadcast %cst_14 : f32 to vector<128x128xf32>
    %19 = arith.subf %18, %17 : vector<128x128xf32>
    %20 = math.exp %19 : vector<128x128xf32>
    %cst_15 = arith.constant 1.000000e+00 : f32
    %21 = vector.broadcast %cst_15 : f32 to vector<128x128xf32>
    %22 = arith.addf %21, %20 : vector<128x128xf32>
    %23 = tpu.reciprocal %22 {approx = true} : vector<128x128xf32> -> vector<128x128xf32>
    %c0_16 = arith.constant 0 : index
    %c0_17 = arith.constant 0 : index
    %24 = vector.load %arg6[%c0_16, %c0_17] : memref<128x128xf32, #tpu.memory_space<vmem>>, vector<128x128xf32>
    tpu.vector_store %arg6[%c0_16, %c0_17], %23 {strides = array<i32>} : memref<128x128xf32, #tpu.memory_space<vmem>>, vector<128x128xf32>,
    return
  }
  func.func @transform_0(%arg0: i32) -> (i32, i32) {
    %c0_i32 = arith.constant 0 : i32
    %c0_i32_0 = arith.constant 0 : i32
    return %arg0, %c0_i32 : i32, i32
  }
  func.func @transform_1(%arg0: i32) -> (i32, i32) {
    %c0_i32 = arith.constant 0 : i32
    %c0_i32_0 = arith.constant 0 : i32
    %c0_i32_1 = arith.constant 0 : i32
    return %c0_i32, %c0_i32_0 : i32, i32
  }
  func.func @transform_2(%arg0: i32) -> (i32, i32) {
    %c0_i32 = arith.constant 0 : i32
    %c0_i32_0 = arith.constant 0 : i32
    %c0_i32_1 = arith.constant 0 : i32
    return %c0_i32, %c0_i32_0 : i32, i32
  }
  func.func @transform_3(%arg0: i32) -> (i32, i32) {
    %c0_i32 = arith.constant 0 : i32
    %c0_i32_0 = arith.constant 0 : i32
    %c0_i32_1 = arith.constant 0 : i32
    return %c0_i32, %c0_i32_0 : i32, i32
  }
  func.func @transform_4(%arg0: i32) -> (i32, i32) {
    %c0_i32 = arith.constant 0 : i32
    %c0_i32_0 = arith.constant 0 : i32
    %c0_i32_1 = arith.constant 0 : i32
    return %c0_i32, %c0_i32_0 : i32, i32
  }
  func.func @transform_5(%arg0: i32) -> (i32, i32) {
    %c0_i32 = arith.constant 0 : i32
    %c0_i32_0 = arith.constant 0 : i32
    return %arg0, %c0_i32 : i32, i32
  }
  func.func @transform_6(%arg0: i32) -> (i32, i32) {
    %c0_i32 = arith.constant 0 : i32
    %c0_i32_0 = arith.constant 0 : i32
    return %arg0, %c0_i32 : i32, i32
  }
}

</mosaic_0001>

<llo_original>
// kernel: _autoencoder_forward_impl.1
$region0: #{_autoencoder_forward_impl.1}
  #allocation0 [shape = 'u32[]', space=smem, size = 0x4, offset = 0x4, fixed_abs, tag = 'smem constant byte address 0x4 - core index']
  #allocation1 [shape = 'u32[144,128]{1,0:T(1,128)}', space=vmem, size = 0x12000, scoped, tag = 'internal scratch']
  %s0 = inlined_call_operand.vmem [shape: f32[384,128], index: 0, kind: input, shape index: {}]
  %s1 = inlined_call_operand.vmem [shape: f32[128,128], index: 1, kind: input, shape index: {}]
  %s2 = inlined_call_operand.vmem [shape: f32[1,128], index: 2, kind: input, shape index: {}]
  %s3 = inlined_call_operand.vmem [shape: f32[128,128], index: 3, kind: input, shape index: {}]
  %s4 = inlined_call_operand.vmem [shape: f32[1,128], index: 4, kind: input, shape index: {}]
  %s5 = inlined_call_operand.vmem [shape: f32[384,128], index: 5, kind: output, shape index: {0}]
  %s6 = inlined_call_operand.vmem [shape: f32[384,128], index: 6, kind: output, shape index: {1}]
  %7 = xla_tuple %s5, %s6
  %s8 = sld [smem:[#allocation0]]
  $region61: #{_autoencoder_forward_impl.1} parent=0
    _
  %s10 = ssub.s32 1, %s8
  %s11 = scalar_select 0, %s10, %s8
  loop: start=0, step=1, limit=5
  $region2: #{_autoencoder_forward_impl.1} parent=0 // loop_pre_header
    _
  $region3: #{_autoencoder_forward_impl.1} parent=0 // loop_header
    %s13 = sphi 0, %s17
    %p14 = scmp.ge.s32.totalorder %s13, 5
    %s23 = sphi 0, %s25
    %s26 = sphi 0, %s23
    %s27 = sphi 0, %s26
    %s43 = sphi 0, %s27
    %s47 = sphi 0, %s47
    %s49 = sphi 0, %s47
    %s50 = sphi 0, %s49
    %s64 = sphi 0, %s50
    %s68 = sphi 0, %s68
    %s70 = sphi 0, %s68
    %s71 = sphi 0, %s70
    %s85 = sphi 0, %s71
    %s89 = sphi 0, %s89
    %s91 = sphi 0, %s89
    %s92 = sphi 0, %s91
    %s106 = sphi 0, %s92
    %s110 = sphi 0, %s110
    %s112 = sphi 0, %s110
    %s113 = sphi 0, %s112
    %s127 = sphi 0, %s113
    %s133 = sphi 0, %s135
    %s136 = sphi 0, %s133
    %s137 = sphi 0, %s136
    %s153 = sphi 0, %s137
    %s159 = sphi 0, %s161
    %s162 = sphi 0, %s159
    %s163 = sphi 0, %s162
    %s179 = sphi 0, %s163
  $region4: #{_autoencoder_forward_impl.1} parent=0 // loop_header_branch
    %16 = sbr.rel (%p14) target = $region8
  $region5: #{_autoencoder_forward_impl.1} parent=0 // loop_body
    %s18 = ssub.s32 %s13, 1
    %s19 = ssub.s32 %s13, 2
    %s20 = sadd.s32 %s13, 1
    %s21 = ssub.s32 %s13, %s20
    %p22 = scmp.eq.s32.totalorder %s21, 0
    %s24 = sadd.s32 %s23, 1
    %s25 = scalar_select %p22, %s23, %s24
    %p28 = pneg %p22
    %p29 = scmp.eq.s32.totalorder %s13, 2
    %p30 = por %p28, %p29
    %p31 = scmp.ne.s32.totalorder %s23, %s26
    %p32 = scmp.eq.s32.totalorder %s13, 0
    %p33 = por %p31, %p32
    %p34 = scmp.ne.s32.totalorder %s23, %s26
    %p35 = scmp.eq.s32.totalorder %s18, 2
    %p36 = por %p34, %p35
    %p37 = scmp.ne.s32.totalorder %s26, %s27
    %p38 = scmp.eq.s32.totalorder %s18, 0
    %p39 = por %p37, %p38
    %p40 = scmp.ne.s32.totalorder %s26, %s27
    %p41 = scmp.eq.s32.totalorder %s19, 2
    %p42 = por %p40, %p41
    %p44 = scmp.ne.s32.totalorder %s27, %s43
    %p45 = scmp.eq.s32.totalorder %s19, 0
    %p46 = por %p44, %p45
    %s48 = sadd.s32 %s47, 1
    %p51 = scmp.eq.s32.totalorder %s13, 2
    %p52 = scmp.ne.s32.totalorder %s47, %s49
    %p53 = scmp.eq.s32.totalorder %s13, 0
    %p54 = por %p52, %p53
    %p55 = scmp.ne.s32.totalorder %s47, %s49
    %p56 = scmp.eq.s32.totalorder %s18, 2
    %p57 = por %p55, %p56
    %p58 = scmp.ne.s32.totalorder %s49, %s50
    %p59 = scmp.eq.s32.totalorder %s18, 0
    %p60 = por %p58, %p59
    %p61 = scmp.ne.s32.totalorder %s49, %s50
    %p62 = scmp.eq.s32.totalorder %s19, 2
    %p63 = por %p61, %p62
    %p65 = scmp.ne.s32.totalorder %s50, %s64
    %p66 = scmp.eq.s32.totalorder %s19, 0
    %p67 = por %p65, %p66
    %s69 = sadd.s32 %s68, 1
    %p72 = scmp.eq.s32.totalorder %s13, 2
    %p73 = scmp.ne.s32.totalorder %s68, %s70
    %p74 = scmp.eq.s32.totalorder %s13, 0
    %p75 = por %p73, %p74
    %p76 = scmp.ne.s32.totalorder %s68, %s70
    %p77 = scmp.eq.s32.totalorder %s18, 2
    %p78 = por %p76, %p77
    %p79 = scmp.ne.s32.totalorder %s70, %s71
    %p80 = scmp.eq.s32.totalorder %s18, 0
    %p81 = por %p79, %p80
    %p82 = scmp.ne.s32.totalorder %s70, %s71
    %p83 = scmp.eq.s32.totalorder %s19, 2
    %p84 = por %p82, %p83
    %p86 = scmp.ne.s32.totalorder %s71, %s85
    %p87 = scmp.eq.s32.totalorder %s19, 0
    %p88 = por %p86, %p87
    %s90 = sadd.s32 %s89, 1
    %p93 = scmp.eq.s32.totalorder %s13, 2
    %p94 = scmp.ne.s32.totalorder %s89, %s91
    %p95 = scmp.eq.s32.totalorder %s13, 0
    %p96 = por %p94, %p95
    %p97 = scmp.ne.s32.totalorder %s89, %s91
    %p98 = scmp.eq.s32.totalorder %s18, 2
    %p99 = por %p97, %p98
    %p100 = scmp.ne.s32.totalorder %s91, %s92
    %p101 = scmp.eq.s32.totalorder %s18, 0
    %p102 = por %p100, %p101
    %p103 = scmp.ne.s32.totalorder %s91, %s92
    %p104 = scmp.eq.s32.totalorder %s19, 2
    %p105 = por %p103, %p104
    %p107 = scmp.ne.s32.totalorder %s92, %s106
    %p108 = scmp.eq.s32.totalorder %s19, 0
    %p109 = por %p107, %p108
    %s111 = sadd.s32 %s110, 1
    %p114 = scmp.eq.s32.totalorder %s13, 2
    %p115 = scmp.ne.s32.totalorder %s110, %s112
    %p116 = scmp.eq.s32.totalorder %s13, 0
    %p117 = por %p115, %p116
    %p118 = scmp.ne.s32.totalorder %s110, %s112
    %p119 = scmp.eq.s32.totalorder %s18, 2
    %p120 = por %p118, %p119
    %p121 = scmp.ne.s32.totalorder %s112, %s113
    %p122 = scmp.eq.s32.totalorder %s18, 0
    %p123 = por %p121, %p122
    %p124 = scmp.ne.s32.totalorder %s112, %s113
    %p125 = scmp.eq.s32.totalorder %s19, 2
    %p126 = por %p124, %p125
    %p128 = scmp.ne.s32.totalorder %s113, %s127
    %p129 = scmp.eq.s32.totalorder %s19, 0
    %p130 = por %p128, %p129
    %s131 = ssub.s32 %s13, %s20
    %p132 = scmp.eq.s32.totalorder %s131, 0
    %s134 = sadd.s32 %s133, 1
    %s135 = scalar_select %p132, %s133, %s134
    %p138 = pneg %p132
    %p139 = scmp.eq.s32.totalorder %s13, 2
    %p140 = por %p138, %p139
    %p141 = scmp.ne.s32.totalorder %s133, %s136
    %p142 = scmp.eq.s32.totalorder %s13, 0
    %p143 = por %p141, %p142
    %p144 = scmp.ne.s32.totalorder %s133, %s136
    %p145 = scmp.eq.s32.totalorder %s18, 2
    %p146 = por %p144, %p145
    %p147 = scmp.ne.s32.totalorder %s136, %s137
    %p148 = scmp.eq.s32.totalorder %s18, 0
    %p149 = por %p147, %p148
    %p150 = scmp.ne.s32.totalorder %s136, %s137
    %p151 = scmp.eq.s32.totalorder %s19, 2
    %p152 = por %p150, %p151
    %p154 = scmp.ne.s32.totalorder %s137, %s153
    %p155 = scmp.eq.s32.totalorder %s19, 0
    %p156 = por %p154, %p155
    %s157 = ssub.s32 %s13, %s20
    %p158 = scmp.eq.s32.totalorder %s157, 0
    %s160 = sadd.s32 %s159, 1
    %s161 = scalar_select %p158, %s159, %s160
    %p164 = pneg %p158
    %p165 = scmp.eq.s32.totalorder %s13, 2
    %p166 = por %p164, %p165
    %p167 = scmp.ne.s32.totalorder %s159, %s162
    %p168 = scmp.eq.s32.totalorder %s13, 0
    %p169 = por %p167, %p168
    %p170 = scmp.ne.s32.totalorder %s159, %s162
    %p171 = scmp.eq.s32.totalorder %s18, 2
    %p172 = por %p170, %p171
    %p173 = scmp.ne.s32.totalorder %s162, %s163
    %p174 = scmp.eq.s32.totalorder %s18, 0
    %p175 = por %p173, %p174
    %p176 = scmp.ne.s32.totalorder %s162, %s163
    %p177 = scmp.eq.s32.totalorder %s19, 2
    %p178 = por %p176, %p177
    %p180 = scmp.ne.s32.totalorder %s163, %s179
    %p181 = scmp.eq.s32.totalorder %s19, 0
    %p182 = por %p180, %p181
    %p183 = scmp.le.s32.totalorder 1, %s13
    %p184 = scmp.lt.s32.totalorder %s13, 4
    %p185 = pnand %p183, %p184
    %p186 = pneg %p185
    // Predicated region
    $region9: #{_autoencoder_forward_impl.1} parent=5 // pred_check
      _
    $region10: #{_autoencoder_forward_impl.1} parent=5 // pred_check_branch
      %188 = sbr.rel (%p185) target = $region12
    $region11: #{_autoencoder_forward_impl.1} parent=5 // pred_region
      %s189 = ssub.s32 %s13, 1
      // Predicated region
      $region13: #{_autoencoder_forward_impl.1} parent=11 // pred_check
        %p190 = pneg %p60
      $region14: #{_autoencoder_forward_impl.1} parent=11 // pred_check_branch
        %192 = sbr.rel (%p190) target = $region16
      $region15: #{_autoencoder_forward_impl.1} parent=11 // pred_region
        _
      $region16: #{_autoencoder_forward_impl.1} parent=11 // pred_fallthru
        _
      // Predicated region
      $region17: #{_autoencoder_forward_impl.1} parent=11 // pred_check
        %p193 = pneg %p81
      $region18: #{_autoencoder_forward_impl.1} parent=11 // pred_check_branch
        %195 = sbr.rel (%p193) target = $region20
      $region19: #{_autoencoder_forward_impl.1} parent=11 // pred_region
        _
      $region20: #{_autoencoder_forward_impl.1} parent=11 // pred_fallthru
        _
      // Predicated region
      $region21: #{_autoencoder_forward_impl.1} parent=11 // pred_check
        %p196 = pneg %p102
      $region22: #{_autoencoder_forward_impl.1} parent=11 // pred_check_branch
        %198 = sbr.rel (%p196) target = $region24
      $region23: #{_autoencoder_forward_impl.1} parent=11 // pred_region
        _
      $region24: #{_autoencoder_forward_impl.1} parent=11 // pred_fallthru
        _
      // Predicated region
      $region25: #{_autoencoder_forward_impl.1} parent=11 // pred_check
        %p199 = pneg %p123
      $region26: #{_autoencoder_forward_impl.1} parent=11 // pred_check_branch
        %201 = sbr.rel (%p199) target = $region28
      $region27: #{_autoencoder_forward_impl.1} parent=11 // pred_region
        _
      $region28: #{_autoencoder_forward_impl.1} parent=11 // pred_fallthru
        _
    $region12: #{_autoencoder_forward_impl.1} parent=5 // pred_fallthru
      _
    %p202 = scmp.lt.s32.totalorder %s13, 3
    // Predicated region
    $region29: #{_autoencoder_forward_impl.1} parent=5 // pred_check
      %p203 = pneg %p202
    $region30: #{_autoencoder_forward_impl.1} parent=5 // pred_check_branch
      %205 = sbr.rel (%p203) target = $region32
    $region31: #{_autoencoder_forward_impl.1} parent=5 // pred_region
      // Predicated region
      $region33: #{_autoencoder_forward_impl.1} parent=31 // pred_check
        %p206 = pneg %p33
      $region34: #{_autoencoder_forward_impl.1} parent=31 // pred_check_branch
        %208 = sbr.rel (%p206) target = $region36
      $region35: #{_autoencoder_forward_impl.1} parent=31 // pred_region
        %s209 = smul.u32 16, %s13
        %p210 = scmp.lt.s32.totalorder %s209, 47
        %s211 = scalar_select %p210, %s209, 47
        %s212 = smul.addr %s211, 8
        %s213 = scalar_lea.vmem %s0, %s212
        %s214 = smul.u32 16, %s13
      $region36: #{_autoencoder_forward_impl.1} parent=31 // pred_fallthru
        _
    $region32: #{_autoencoder_forward_impl.1} parent=5 // pred_fallthru
      _
    %p215 = scmp.le.s32.totalorder 1, %s13
    %p216 = scmp.lt.s32.totalorder %s13, 4
    %p217 = pnand %p215, %p216
    %p218 = pneg %p217
    // Predicated region
    $region37: #{_autoencoder_forward_impl.1} parent=5 // pred_check
      _
    $region38: #{_autoencoder_forward_impl.1} parent=5 // pred_check_branch
      %220 = sbr.rel (%p217) target = $region40
    $region39: #{_autoencoder_forward_impl.1} parent=5 // pred_region
      %s221 = ssub.s32 %s13, 1
      %s222 = smul.u32 16, %s18
      %p223 = scmp.lt.s32.totalorder %s222, 47
      %s224 = scalar_select %p223, %s222, 47
      %s225 = smul.addr %s224, 8
      %s226 = scalar_lea.vmem %s0, %s225
      %p227 = pneg %p39
      %p228 = pneg %p36
      %p229 = pneg %p60
      %p230 = pneg %p57
      %p231 = pneg %p81
      %p232 = pneg %p78
      %p233 = pneg %p102
      %p234 = pneg %p99
      %p235 = pneg %p123
      %p236 = pneg %p120
      %p237 = pneg %p149
      %p238 = pneg %p146
      %s239 = smul.u32 16, %s18
      %p240 = scmp.lt.s32.totalorder %s239, 47
      %s241 = scalar_select %p240, %s239, 47
      %s242 = smul.addr %s241, 8
      %s243 = scalar_lea.vmem %s5, %s242
      %p244 = pneg %p175
      %p245 = pneg %p172
      %s246 = smul.u32 16, %s18
      %p247 = scmp.lt.s32.totalorder %s246, 47
      %s248 = scalar_select %p247, %s246, 47
      %s249 = smul.addr %s248, 8
      %s250 = scalar_lea.vmem %s6, %s249
      %s251 = smul.u32 16, %s18
      %p252 = scmp.lt.s32.totalorder %s251, 47
      %s253 = scalar_select %p252, %s251, 47
      %s254 = smul.addr %s253, 8
      %s255 = scalar_lea.vmem %s0, %s254
      %s256 = smul.u32 16, %s18
      %s257 = smul.u32 16, %s18
      %p258 = scmp.lt.s32.totalorder %s257, 47
      %s259 = scalar_select %p258, %s257, 47
      %s260 = smul.addr %s259, 8
      %s261 = scalar_lea.vmem %s5, %s260
      %s262 = smul.u32 16, %s18
      %s263 = smul.u32 16, %s18
      %p264 = scmp.lt.s32.totalorder %s263, 47
      %s265 = scalar_select %p264, %s263, 47
      %s266 = smul.addr %s265, 8
      %s267 = scalar_lea.vmem %s6, %s266
      %s268 = smul.u32 16, %s18
      %v269 = vld [vmem:[%s255] sm:$0xff]
      %v270 = vld [vmem:[%s255 + $0x8] sm:$0xff]
      %v271 = vld [vmem:[%s255 + $0x10] sm:$0xff]
      %v272 = vld [vmem:[%s255 + $0x18] sm:$0xff]
      %v273 = vld [vmem:[%s255 + $0x20] sm:$0xff]
      %v274 = vld [vmem:[%s255 + $0x28] sm:$0xff]
      %v275 = vld [vmem:[%s255 + $0x30] sm:$0xff]
      %v276 = vld [vmem:[%s255 + $0x38] sm:$0xff]
      %v277 = vld [vmem:[%s255 + $0x40] sm:$0xff]
      %v278 = vld [vmem:[%s255 + $0x48] sm:$0xff]
      %v279 = vld [vmem:[%s255 + $0x50] sm:$0xff]
      %v280 = vld [vmem:[%s255 + $0x58] sm:$0xff]
      %v281 = vld [vmem:[%s255 + $0x60] sm:$0xff]
      %v282 = vld [vmem:[%s255 + $0x68] sm:$0xff]
      %v283 = vld [vmem:[%s255 + $0x70] sm:$0xff]
      %v284 = vld [vmem:[%s255 + $0x78] sm:$0xff]
      %v285 = vld [vmem:[%s1] sm:$0xff]
      %v286 = vld [vmem:[%s1 + $0x8] sm:$0xff]
      %v287 = vld [vmem:[%s1 + $0x10] sm:$0xff]
      %v288 = vld [vmem:[%s1 + $0x18] sm:$0xff]
      %v289 = vld [vmem:[%s1 + $0x20] sm:$0xff]
      %v290 = vld [vmem:[%s1 + $0x28] sm:$0xff]
      %v291 = vld [vmem:[%s1 + $0x30] sm:$0xff]
      %v292 = vld [vmem:[%s1 + $0x38] sm:$0xff]
      %v293 = vld [vmem:[%s1 + $0x40] sm:$0xff]
      %v294 = vld [vmem:[%s1 + $0x48] sm:$0xff]
      %v295 = vld [vmem:[%s1 + $0x50] sm:$0xff]
      %v296 = vld [vmem:[%s1 + $0x58] sm:$0xff]
      %v297 = vld [vmem:[%s1 + $0x60] sm:$0xff]
      %v298 = vld [vmem:[%s1 + $0x68] sm:$0xff]
      %v299 = vld [vmem:[%s1 + $0x70] sm:$0xff]
      %v300 = vld [vmem:[%s1 + $0x78] sm:$0xff]
      %v301 = vld [vmem:[%s2] sm:$0x1]
      %v303 = vlaneseq
      %v304 = vshrl.u32 %v303, 7
      %v305 = vsub.s32 0, %v304
      %v306 = vrot.slane %v301, %v305
      %308 = vmatprep.subr.mxu0 0.0
      %309 = vmatpush1.msra.mxu0 %v300
      %310 = vmatprep.subr.mxu0 0.0
      %311 = vmatpush1.msra.mxu0 %v299
      %312 = vmatprep.subr.mxu0 0.0
      %313 = vmatpush1.msra.mxu0 %v298
      %314 = vmatprep.subr.mxu0 0.0
      %315 = vmatpush1.msra.mxu0 %v297
      %316 = vmatprep.subr.mxu0 0.0
      %317 = vmatpush1.msra.mxu0 %v296
      %318 = vmatprep.subr.mxu0 0.0
      %319 = vmatpush1.msra.mxu0 %v295
      %320 = vmatprep.subr.mxu0 0.0
      %321 = vmatpush1.msra.mxu0 %v294
      %322 = vmatprep.subr.mxu0 0.0
      %323 = vmatpush1.msra.mxu0 %v293
      %324 = vmatprep.subr.mxu0 0.0
      %325 = vmatpush1.msra.mxu0 %v292
      %326 = vmatprep.subr.mxu0 0.0
      %327 = vmatpush1.msra.mxu0 %v291
      %328 = vmatprep.subr.mxu0 0.0
      %329 = vmatpush1.msra.mxu0 %v290
      %330 = vmatprep.subr.mxu0 0.0
      %331 = vmatpush1.msra.mxu0 %v289
      %332 = vmatprep.subr.mxu0 0.0
      %333 = vmatpush1.msra.mxu0 %v288
      %334 = vmatprep.subr.mxu0 0.0
      %335 = vmatpush1.msra.mxu0 %v287
      %336 = vmatprep.subr.mxu0 0.0
      %337 = vmatpush1.msra.mxu0 %v286
      %338 = vmatprep.subr.mxu0 0.0
      %339 = vmatpush1.msra.mxu0 %v285
      %340 = vmatprep.subr.mxu0 0.0
      %341 = vmatpush2.msra.mxu0 0.0
      %342 = vmatprep.subr.mxu0 0.0
      %343 = vmatpush2.msra.mxu0 0.0
      %344 = vmatprep.subr.mxu0 0.0
      %345 = vmatpush2.msra.mxu0 0.0
      %346 = vmatprep.subr.mxu0 0.0
      %347 = vmatpush2.msra.mxu0 0.0
      %348 = vmatprep.subr.mxu0 0.0
      %349 = vmatpush2.msra.mxu0 0.0
      %350 = vmatprep.subr.mxu0 0.0
      %351 = vmatpush2.msra.mxu0 0.0
      %352 = vmatprep.subr.mxu0 0.0
      %353 = vmatpush2.msra.mxu0 0.0
      %354 = vmatprep.subr.mxu0 0.0
      %355 = vmatpush2.msra.mxu0 0.0
      %356 = vmatprep.subr.mxu0 0.0
      %357 = vmatpush2.msra.mxu0 0.0
      %358 = vmatprep.subr.mxu0 0.0
      %359 = vmatpush2.msra.mxu0 0.0
      %360 = vmatprep.subr.mxu0 0.0
      %361 = vmatpush2.msra.mxu0 0.0
      %362 = vmatprep.subr.mxu0 0.0
      %363 = vmatpush2.msra.mxu0 0.0
      %364 = vmatprep.subr.mxu0 0.0
      %365 = vmatpush2.msra.mxu0 0.0
      %366 = vmatprep.subr.mxu0 0.0
      %367 = vmatpush2.msra.mxu0 0.0
      %368 = vmatprep.subr.mxu0 0.0
      %369 = vmatpush2.msra.mxu0 0.0
      %370 = vmatprep.subr.mxu0 0.0
      %371 = vmatpush2.msra.mxu0 0.0
      %372 = vmatprep.mubr.f32.mxu0 0.0
      %373 = vmatmul.mubr.f32.gmra.mxu0 %v269
      %v374 = vpop.f32.mrf.mxu0
      %v375 = vadd.f32 %v306, %v374
      %v376 = vpop.f32.mrf.mxu0
      %377 = vmatprep.mubr.f32.mxu0 0.0
      %378 = vmatmul.mubr.f32.gmra.mxu0 %v270
      %v379 = vpop.f32.mrf.mxu0
      %v380 = vadd.f32 %v306, %v379
      %v381 = vpop.f32.mrf.mxu0
      %382 = vmatprep.mubr.f32.mxu0 0.0
      %383 = vmatmul.mubr.f32.gmra.mxu0 %v271
      %v384 = vpop.f32.mrf.mxu0
      %v385 = vadd.f32 %v306, %v384
      %v386 = vpop.f32.mrf.mxu0
      %387 = vmatprep.mubr.f32.mxu0 0.0
      %388 = vmatmul.mubr.f32.gmra.mxu0 %v272
      %v389 = vpop.f32.mrf.mxu0
      %v390 = vadd.f32 %v306, %v389
      %v391 = vpop.f32.mrf.mxu0
      %392 = vmatprep.mubr.f32.mxu0 0.0
      %393 = vmatmul.mubr.f32.gmra.mxu0 %v273
      %v394 = vpop.f32.mrf.mxu0
      %v395 = vadd.f32 %v306, %v394
      %v396 = vpop.f32.mrf.mxu0
      %397 = vmatprep.mubr.f32.mxu0 0.0
      %398 = vmatmul.mubr.f32.gmra.mxu0 %v274
      %v399 = vpop.f32.mrf.mxu0
      %v400 = vadd.f32 %v306, %v399
      %v401 = vpop.f32.mrf.mxu0
      %402 = vmatprep.mubr.f32.mxu0 0.0
      %403 = vmatmul.mubr.f32.gmra.mxu0 %v275
      %v404 = vpop.f32.mrf.mxu0
      %v405 = vadd.f32 %v306, %v404
      %v406 = vpop.f32.mrf.mxu0
      %407 = vmatprep.mubr.f32.mxu0 0.0
      %408 = vmatmul.mubr.f32.gmra.mxu0 %v276
      %v409 = vpop.f32.mrf.mxu0
      %v410 = vadd.f32 %v306, %v409
      %v411 = vpop.f32.mrf.mxu0
      %412 = vmatprep.mubr.f32.mxu0 0.0
      %413 = vmatmul.mubr.f32.gmra.mxu0 %v277
      %v414 = vpop.f32.mrf.mxu0
      %v415 = vadd.f32 %v306, %v414
      %v416 = vpop.f32.mrf.mxu0
      %417 = vmatprep.mubr.f32.mxu0 0.0
      %418 = vmatmul.mubr.f32.gmra.mxu0 %v278
      %v419 = vpop.f32.mrf.mxu0
      %v420 = vadd.f32 %v306, %v419
      %v421 = vpop.f32.mrf.mxu0
      %422 = vmatprep.mubr.f32.mxu0 0.0
      %423 = vmatmul.mubr.f32.gmra.mxu0 %v279
      %v424 = vpop.f32.mrf.mxu0
      %v425 = vadd.f32 %v306, %v424
      %v426 = vpop.f32.mrf.mxu0
      %427 = vmatprep.mubr.f32.mxu0 0.0
      %428 = vmatmul.mubr.f32.gmra.mxu0 %v280
      %v429 = vpop.f32.mrf.mxu0
      %v430 = vadd.f32 %v306, %v429
      %v431 = vpop.f32.mrf.mxu0
      %432 = vmatprep.mubr.f32.mxu0 0.0
      %433 = vmatmul.mubr.f32.gmra.mxu0 %v281
      %v434 = vpop.f32.mrf.mxu0
      %v435 = vadd.f32 %v306, %v434
      %v436 = vpop.f32.mrf.mxu0
      %437 = vmatprep.mubr.f32.mxu0 0.0
      %438 = vmatmul.mubr.f32.gmra.mxu0 %v282
      %v439 = vpop.f32.mrf.mxu0
      %v440 = vadd.f32 %v306, %v439
      %v441 = vpop.f32.mrf.mxu0
      %442 = vmatprep.mubr.f32.mxu0 0.0
      %443 = vmatmul.mubr.f32.gmra.mxu0 %v283
      %v444 = vpop.f32.mrf.mxu0
      %v445 = vadd.f32 %v306, %v444
      %v446 = vpop.f32.mrf.mxu0
      %447 = vmatprep.mubr.f32.mxu0 0.0
      %448 = vmatmul.mubr.f32.gmra.mxu0 %v284
      %v449 = vpop.f32.mrf.mxu0
      %v450 = vadd.f32 %v306, %v449
      %v451 = vpop.f32.mrf.mxu0
      %452 = vdwg.mxu0
      %v453 = vsub.f32 0.0, %v375
      %v454 = vsub.f32 0.0, %v380
      %v455 = vsub.f32 0.0, %v385
      %v456 = vsub.f32 0.0, %v390
      %v457 = vsub.f32 0.0, %v395
      %v458 = vsub.f32 0.0, %v400
      %v459 = vsub.f32 0.0, %v405
      %v460 = vsub.f32 0.0, %v410
      %v461 = vsub.f32 0.0, %v415
      %v462 = vsub.f32 0.0, %v420
      %v463 = vsub.f32 0.0, %v425
      %v464 = vsub.f32 0.0, %v430
      %v465 = vsub.f32 0.0, %v435
      %v466 = vsub.f32 0.0, %v440
      %v467 = vsub.f32 0.0, %v445
      %v468 = vsub.f32 0.0, %v450
      %v469 = vmul.f32 %v453, 1.442695
      %v470 = vpow.pop %v469
      %v471 = vmul.f32 %v454, 1.442695
      %v472 = vpow.pop %v471
      %v473 = vmul.f32 %v455, 1.442695
      %v474 = vpow.pop %v473
      %v475 = vmul.f32 %v456, 1.442695
      %v476 = vpow.pop %v475
      %v477 = vmul.f32 %v457, 1.442695
      %v478 = vpow.pop %v477
      %v479 = vmul.f32 %v458, 1.442695
      %v480 = vpow.pop %v479
      %v481 = vmul.f32 %v459, 1.442695
      %v482 = vpow.pop %v481
      %v483 = vmul.f32 %v460, 1.442695
      %v484 = vpow.pop %v483
      %v485 = vmul.f32 %v461, 1.442695
      %v486 = vpow.pop %v485
      %v487 = vmul.f32 %v462, 1.442695
      %v488 = vpow.pop %v487
      %v489 = vmul.f32 %v463, 1.442695
      %v490 = vpow.pop %v489
      %v491 = vmul.f32 %v464, 1.442695
      %v492 = vpow.pop %v491
      %v493 = vmul.f32 %v465, 1.442695
      %v494 = vpow.pop %v493
      %v495 = vmul.f32 %v466, 1.442695
      %v496 = vpow.pop %v495
      %v497 = vmul.f32 %v467, 1.442695
      %v498 = vpow.pop %v497
      %v499 = vmul.f32 %v468, 1.442695
      %v500 = vpow.pop %v499
      %v501 = vadd.f32 %v470, 1.0
      %v502 = vadd.f32 %v472, 1.0
      %v503 = vadd.f32 %v474, 1.0
      %v504 = vadd.f32 %v476, 1.0
      %v505 = vadd.f32 %v478, 1.0
      %v506 = vadd.f32 %v480, 1.0
      %v507 = vadd.f32 %v482, 1.0
      %v508 = vadd.f32 %v484, 1.0
      %v509 = vadd.f32 %v486, 1.0
      %v510 = vadd.f32 %v488, 1.0
      %v511 = vadd.f32 %v490, 1.0
      %v512 = vadd.f32 %v492, 1.0
      %v513 = vadd.f32 %v494, 1.0
      %v514 = vadd.f32 %v496, 1.0
      %v515 = vadd.f32 %v498, 1.0
      %v516 = vadd.f32 %v500, 1.0
      %v517 = vrcp.pop %v501
      %v518 = vrcp.pop %v502
      %v519 = vrcp.pop %v503
      %v520 = vrcp.pop %v504
      %v521 = vrcp.pop %v505
      %v522 = vrcp.pop %v506
      %v523 = vrcp.pop %v507
      %v524 = vrcp.pop %v508
      %v525 = vrcp.pop %v509
      %v526 = vrcp.pop %v510
      %v527 = vrcp.pop %v511
      %v528 = vrcp.pop %v512
      %v529 = vrcp.pop %v513
      %v530 = vrcp.pop %v514
      %v531 = vrcp.pop %v515
      %v532 = vrcp.pop %v516
      %533 = vst [vmem:[%s267] sm:$0xff] %v517
      %534 = vst [vmem:[%s267 + $0x8] sm:$0xff] %v518
      %535 = vst [vmem:[%s267 + $0x10] sm:$0xff] %v519
      %536 = vst [vmem:[%s267 + $0x18] sm:$0xff] %v520
      %537 = vst [vmem:[%s267 + $0x20] sm:$0xff] %v521
      %538 = vst [vmem:[%s267 + $0x28] sm:$0xff] %v522
      %539 = vst [vmem:[%s267 + $0x30] sm:$0xff] %v523
      %540 = vst [vmem:[%s267 + $0x38] sm:$0xff] %v524
      %541 = vst [vmem:[%s267 + $0x40] sm:$0xff] %v525
      %542 = vst [vmem:[%s267 + $0x48] sm:$0xff] %v526
      %543 = vst [vmem:[%s267 + $0x50] sm:$0xff] %v527
      %544 = vst [vmem:[%s267 + $0x58] sm:$0xff] %v528
      %545 = vst [vmem:[%s267 + $0x60] sm:$0xff] %v529
      %546 = vst [vmem:[%s267 + $0x68] sm:$0xff] %v530
      %547 = vst [vmem:[%s267 + $0x70] sm:$0xff] %v531
      %548 = vst [vmem:[%s267 + $0x78] sm:$0xff] %v532
      %v549 = vld [vmem:[%s3] sm:$0xff]
      %v550 = vld [vmem:[%s3 + $0x8] sm:$0xff]
      %v551 = vld [vmem:[%s3 + $0x10] sm:$0xff]
      %v552 = vld [vmem:[%s3 + $0x18] sm:$0xff]
      %v553 = vld [vmem:[%s3 + $0x20] sm:$0xff]
      %v554 = vld [vmem:[%s3 + $0x28] sm:$0xff]
      %v555 = vld [vmem:[%s3 + $0x30] sm:$0xff]
      %v556 = vld [vmem:[%s3 + $0x38] sm:$0xff]
      %v557 = vld [vmem:[%s3 + $0x40] sm:$0xff]
      %v558 = vld [vmem:[%s3 + $0x48] sm:$0xff]
      %v559 = vld [vmem:[%s3 + $0x50] sm:$0xff]
      %v560 = vld [vmem:[%s3 + $0x58] sm:$0xff]
      %v561 = vld [vmem:[%s3 + $0x60] sm:$0xff]
      %v562 = vld [vmem:[%s3 + $0x68] sm:$0xff]
      %v563 = vld [vmem:[%s3 + $0x70] sm:$0xff]
      %v564 = vld [vmem:[%s3 + $0x78] sm:$0xff]
      %v565 = vld [vmem:[%s4] sm:$0x1]
      %v567 = vlaneseq
      %v568 = vshrl.u32 %v567, 7
      %v569 = vsub.s32 0, %v568
      %v570 = vrot.slane %v565, %v569
      %572 = vmatprep.subr.mxu0 0.0
      %573 = vmatpush1.msra.mxu0 %v564
      %574 = vmatprep.subr.mxu0 0.0
      %575 = vmatpush1.msra.mxu0 %v563
      %576 = vmatprep.subr.mxu0 0.0
      %577 = vmatpush1.msra.mxu0 %v562
      %578 = vmatprep.subr.mxu0 0.0
      %579 = vmatpush1.msra.mxu0 %v561
      %580 = vmatprep.subr.mxu0 0.0
      %581 = vmatpush1.msra.mxu0 %v560
      %582 = vmatprep.subr.mxu0 0.0
      %583 = vmatpush1.msra.mxu0 %v559
      %584 = vmatprep.subr.mxu0 0.0
      %585 = vmatpush1.msra.mxu0 %v558
      %586 = vmatprep.subr.mxu0 0.0
      %587 = vmatpush1.msra.mxu0 %v557
      %588 = vmatprep.subr.mxu0 0.0
      %589 = vmatpush1.msra.mxu0 %v556
      %590 = vmatprep.subr.mxu0 0.0
      %591 = vmatpush1.msra.mxu0 %v555
      %592 = vmatprep.subr.mxu0 0.0
      %593 = vmatpush1.msra.mxu0 %v554
      %594 = vmatprep.subr.mxu0 0.0
      %595 = vmatpush1.msra.mxu0 %v553
      %596 = vmatprep.subr.mxu0 0.0
      %597 = vmatpush1.msra.mxu0 %v552
      %598 = vmatprep.subr.mxu0 0.0
      %599 = vmatpush1.msra.mxu0 %v551
      %600 = vmatprep.subr.mxu0 0.0
      %601 = vmatpush1.msra.mxu0 %v550
      %602 = vmatprep.subr.mxu0 0.0
      %603 = vmatpush1.msra.mxu0 %v549
      %604 = vmatprep.subr.mxu0 0.0
      %605 = vmatpush2.msra.mxu0 0.0
      %606 = vmatprep.subr.mxu0 0.0
      %607 = vmatpush2.msra.mxu0 0.0
      %608 = vmatprep.subr.mxu0 0.0
      %609 = vmatpush2.msra.mxu0 0.0
      %610 = vmatprep.subr.mxu0 0.0
      %611 = vmatpush2.msra.mxu0 0.0
      %612 = vmatprep.subr.mxu0 0.0
      %613 = vmatpush2.msra.mxu0 0.0
      %614 = vmatprep.subr.mxu0 0.0
      %615 = vmatpush2.msra.mxu0 0.0
      %616 = vmatprep.subr.mxu0 0.0
      %617 = vmatpush2.msra.mxu0 0.0
      %618 = vmatprep.subr.mxu0 0.0
      %619 = vmatpush2.msra.mxu0 0.0
      %620 = vmatprep.subr.mxu0 0.0
      %621 = vmatpush2.msra.mxu0 0.0
      %622 = vmatprep.subr.mxu0 0.0
      %623 = vmatpush2.msra.mxu0 0.0
      %624 = vmatprep.subr.mxu0 0.0
      %625 = vmatpush2.msra.mxu0 0.0
      %626 = vmatprep.subr.mxu0 0.0
      %627 = vmatpush2.msra.mxu0 0.0
      %628 = vmatprep.subr.mxu0 0.0
      %629 = vmatpush2.msra.mxu0 0.0
      %630 = vmatprep.subr.mxu0 0.0
      %631 = vmatpush2.msra.mxu0 0.0
      %632 = vmatprep.subr.mxu0 0.0
      %633 = vmatpush2.msra.mxu0 0.0
      %634 = vmatprep.subr.mxu0 0.0
      %635 = vmatpush2.msra.mxu0 0.0
      %636 = vmatprep.mubr.f32.mxu0 0.0
      %637 = vmatmul.mubr.f32.gmra.mxu0 %v517
      %v638 = vpop.f32.mrf.mxu0
      %v639 = vadd.f32 %v570, %v638
      %v640 = vpop.f32.mrf.mxu0
      %641 = vmatprep.mubr.f32.mxu0 0.0
      %642 = vmatmul.mubr.f32.gmra.mxu0 %v518
      %v643 = vpop.f32.mrf.mxu0
      %v644 = vadd.f32 %v570, %v643
      %v645 = vpop.f32.mrf.mxu0
      %646 = vmatprep.mubr.f32.mxu0 0.0
      %647 = vmatmul.mubr.f32.gmra.mxu0 %v519
      %v648 = vpop.f32.mrf.mxu0
      %v649 = vadd.f32 %v570, %v648
      %v650 = vpop.f32.mrf.mxu0
      %651 = vmatprep.mubr.f32.mxu0 0.0
      %652 = vmatmul.mubr.f32.gmra.mxu0 %v520
      %v653 = vpop.f32.mrf.mxu0
      %v654 = vadd.f32 %v570, %v653
      %v655 = vpop.f32.mrf.mxu0
      %656 = vmatprep.mubr.f32.mxu0 0.0
      %657 = vmatmul.mubr.f32.gmra.mxu0 %v521
      %v658 = vpop.f32.mrf.mxu0
      %v659 = vadd.f32 %v570, %v658
      %v660 = vpop.f32.mrf.mxu0
      %661 = vmatprep.mubr.f32.mxu0 0.0
      %662 = vmatmul.mubr.f32.gmra.mxu0 %v522
      %v663 = vpop.f32.mrf.mxu0
      %v664 = vadd.f32 %v570, %v663
      %v665 = vpop.f32.mrf.mxu0
      %666 = vmatprep.mubr.f32.mxu0 0.0
      %667 = vmatmul.mubr.f32.gmra.mxu0 %v523
      %v668 = vpop.f32.mrf.mxu0
      %v669 = vadd.f32 %v570, %v668
      %v670 = vpop.f32.mrf.mxu0
      %671 = vmatprep.mubr.f32.mxu0 0.0
      %672 = vmatmul.mubr.f32.gmra.mxu0 %v524
      %v673 = vpop.f32.mrf.mxu0
      %v674 = vadd.f32 %v570, %v673
      %v675 = vpop.f32.mrf.mxu0
      %676 = vmatprep.mubr.f32.mxu0 0.0
      %677 = vmatmul.mubr.f32.gmra.mxu0 %v525
      %v678 = vpop.f32.mrf.mxu0
      %v679 = vadd.f32 %v570, %v678
      %v680 = vpop.f32.mrf.mxu0
      %681 = vmatprep.mubr.f32.mxu0 0.0
      %682 = vmatmul.mubr.f32.gmra.mxu0 %v526
      %v683 = vpop.f32.mrf.mxu0
      %v684 = vadd.f32 %v570, %v683
      %v685 = vpop.f32.mrf.mxu0
      %686 = vmatprep.mubr.f32.mxu0 0.0
      %687 = vmatmul.mubr.f32.gmra.mxu0 %v527
      %v688 = vpop.f32.mrf.mxu0
      %v689 = vadd.f32 %v570, %v688
      %v690 = vpop.f32.mrf.mxu0
      %691 = vmatprep.mubr.f32.mxu0 0.0
      %692 = vmatmul.mubr.f32.gmra.mxu0 %v528
      %v693 = vpop.f32.mrf.mxu0
      %v694 = vadd.f32 %v570, %v693
      %v695 = vpop.f32.mrf.mxu0
      %696 = vmatprep.mubr.f32.mxu0 0.0
      %697 = vmatmul.mubr.f32.gmra.mxu0 %v529
      %v698 = vpop.f32.mrf.mxu0
      %v699 = vadd.f32 %v570, %v698
      %v700 = vpop.f32.mrf.mxu0
      %701 = vmatprep.mubr.f32.mxu0 0.0
      %702 = vmatmul.mubr.f32.gmra.mxu0 %v530
      %v703 = vpop.f32.mrf.mxu0
      %v704 = vadd.f32 %v570, %v703
      %v705 = vpop.f32.mrf.mxu0
      %706 = vmatprep.mubr.f32.mxu0 0.0
      %707 = vmatmul.mubr.f32.gmra.mxu0 %v531
      %v708 = vpop.f32.mrf.mxu0
      %v709 = vadd.f32 %v570, %v708
      %v710 = vpop.f32.mrf.mxu0
      %711 = vmatprep.mubr.f32.mxu0 0.0
      %712 = vmatmul.mubr.f32.gmra.mxu0 %v532
      %v713 = vpop.f32.mrf.mxu0
      %v714 = vadd.f32 %v570, %v713
      %v715 = vpop.f32.mrf.mxu0
      %716 = vdwg.mxu0
      %v717 = vsub.f32 0.0, %v639
      %v718 = vsub.f32 0.0, %v644
      %v719 = vsub.f32 0.0, %v649
      %v720 = vsub.f32 0.0, %v654
      %v721 = vsub.f32 0.0, %v659
      %v722 = vsub.f32 0.0, %v664
      %v723 = vsub.f32 0.0, %v669
      %v724 = vsub.f32 0.0, %v674
      %v725 = vsub.f32 0.0, %v679
      %v726 = vsub.f32 0.0, %v684
      %v727 = vsub.f32 0.0, %v689
      %v728 = vsub.f32 0.0, %v694
      %v729 = vsub.f32 0.0, %v699
      %v730 = vsub.f32 0.0, %v704
      %v731 = vsub.f32 0.0, %v709
      %v732 = vsub.f32 0.0, %v714
      %v733 = vmul.f32 %v717, 1.442695
      %v734 = vpow.pop %v733
      %v735 = vmul.f32 %v718, 1.442695
      %v736 = vpow.pop %v735
      %v737 = vmul.f32 %v719, 1.442695
      %v738 = vpow.pop %v737
      %v739 = vmul.f32 %v720, 1.442695
      %v740 = vpow.pop %v739
      %v741 = vmul.f32 %v721, 1.442695
      %v742 = vpow.pop %v741
      %v743 = vmul.f32 %v722, 1.442695
      %v744 = vpow.pop %v743
      %v745 = vmul.f32 %v723, 1.442695
      %v746 = vpow.pop %v745
      %v747 = vmul.f32 %v724, 1.442695
      %v748 = vpow.pop %v747
      %v749 = vmul.f32 %v725, 1.442695
      %v750 = vpow.pop %v749
      %v751 = vmul.f32 %v726, 1.442695
      %v752 = vpow.pop %v751
      %v753 = vmul.f32 %v727, 1.442695
      %v754 = vpow.pop %v753
      %v755 = vmul.f32 %v728, 1.442695
      %v756 = vpow.pop %v755
      %v757 = vmul.f32 %v729, 1.442695
      %v758 = vpow.pop %v757
      %v759 = vmul.f32 %v730, 1.442695
      %v760 = vpow.pop %v759
      %v761 = vmul.f32 %v731, 1.442695
      %v762 = vpow.pop %v761
      %v763 = vmul.f32 %v732, 1.442695
      %v764 = vpow.pop %v763
      %v765 = vadd.f32 %v734, 1.0
      %v766 = vadd.f32 %v736, 1.0
      %v767 = vadd.f32 %v738, 1.0
      %v768 = vadd.f32 %v740, 1.0
      %v769 = vadd.f32 %v742, 1.0
      %v770 = vadd.f32 %v744, 1.0
      %v771 = vadd.f32 %v746, 1.0
      %v772 = vadd.f32 %v748, 1.0
      %v773 = vadd.f32 %v750, 1.0
      %v774 = vadd.f32 %v752, 1.0
      %v775 = vadd.f32 %v754, 1.0
      %v776 = vadd.f32 %v756, 1.0
      %v777 = vadd.f32 %v758, 1.0
      %v778 = vadd.f32 %v760, 1.0
      %v779 = vadd.f32 %v762, 1.0
      %v780 = vadd.f32 %v764, 1.0
      %v781 = vrcp.pop %v765
      %v782 = vrcp.pop %v766
      %v783 = vrcp.pop %v767
      %v784 = vrcp.pop %v768
      %v785 = vrcp.pop %v769
      %v786 = vrcp.pop %v770
      %v787 = vrcp.pop %v771
      %v788 = vrcp.pop %v772
      %v789 = vrcp.pop %v773
      %v790 = vrcp.pop %v774
      %v791 = vrcp.pop %v775
      %v792 = vrcp.pop %v776
      %v793 = vrcp.pop %v777
      %v794 = vrcp.pop %v778
      %v795 = vrcp.pop %v779
      %v796 = vrcp.pop %v780
      %797 = vst [vmem:[%s261] sm:$0xff] %v781
      %798 = vst [vmem:[%s261 + $0x8] sm:$0xff] %v782
      %799 = vst [vmem:[%s261 + $0x10] sm:$0xff] %v783
      %800 = vst [vmem:[%s261 + $0x18] sm:$0xff] %v784
      %801 = vst [vmem:[%s261 + $0x20] sm:$0xff] %v785
      %802 = vst [vmem:[%s261 + $0x28] sm:$0xff] %v786
      %803 = vst [vmem:[%s261 + $0x30] sm:$0xff] %v787
      %804 = vst [vmem:[%s261 + $0x38] sm:$0xff] %v788
      %805 = vst [vmem:[%s261 + $0x40] sm:$0xff] %v789
      %806 = vst [vmem:[%s261 + $0x48] sm:$0xff] %v790
      %807 = vst [vmem:[%s261 + $0x50] sm:$0xff] %v791
      %808 = vst [vmem:[%s261 + $0x58] sm:$0xff] %v792
      %809 = vst [vmem:[%s261 + $0x60] sm:$0xff] %v793
      %810 = vst [vmem:[%s261 + $0x68] sm:$0xff] %v794
      %811 = vst [vmem:[%s261 + $0x70] sm:$0xff] %v795
      %812 = vst [vmem:[%s261 + $0x78] sm:$0xff] %v796
      %s813 = smul.u32 16, %s18
      %p814 = scmp.lt.s32.totalorder %s813, 47
      %s815 = scalar_select %p814, %s813, 47
      %s816 = smul.addr %s815, 8
      %s817 = scalar_lea.vmem %s5, %s816
      %s818 = smul.u32 16, %s18
      %p819 = scmp.lt.s32.totalorder %s818, 47
      %s820 = scalar_select %p819, %s818, 47
      %s821 = smul.addr %s820, 8
      %s822 = scalar_lea.vmem %s6, %s821
      // Predicated region
      $region41: #{_autoencoder_forward_impl.1} parent=39 // pred_check
        %p823 = pneg %p146
      $region42: #{_autoencoder_forward_impl.1} parent=39 // pred_check_branch
        %825 = sbr.rel (%p823) target = $region44
      $region43: #{_autoencoder_forward_impl.1} parent=39 // pred_region
        %s826 = smul.u32 16, %s18
      $region44: #{_autoencoder_forward_impl.1} parent=39 // pred_fallthru
        _
      // Predicated region
      $region45: #{_autoencoder_forward_impl.1} parent=39 // pred_check
        %p827 = pneg %p172
      $region46: #{_autoencoder_forward_impl.1} parent=39 // pred_check_branch
        %829 = sbr.rel (%p827) target = $region48
      $region47: #{_autoencoder_forward_impl.1} parent=39 // pred_region
        %s830 = smul.u32 16, %s18
      $region48: #{_autoencoder_forward_impl.1} parent=39 // pred_fallthru
        _
    $region40: #{_autoencoder_forward_impl.1} parent=5 // pred_fallthru
      _
    %p831 = scmp.le.s32.totalorder 2, %s13
    // Predicated region
    $region49: #{_autoencoder_forward_impl.1} parent=5 // pred_check
      %p832 = pneg %p831
    $region50: #{_autoencoder_forward_impl.1} parent=5 // pred_check_branch
      %834 = sbr.rel (%p832) target = $region52
    $region51: #{_autoencoder_forward_impl.1} parent=5 // pred_region
      %s835 = ssub.s32 %s13, 2
      // Predicated region
      $region53: #{_autoencoder_forward_impl.1} parent=51 // pred_check
        %p836 = pneg %p152
      $region54: #{_autoencoder_forward_impl.1} parent=51 // pred_check_branch
        %838 = sbr.rel (%p836) target = $region56
      $region55: #{_autoencoder_forward_impl.1} parent=51 // pred_region
        %s839 = smul.u32 16, %s19
        %p840 = scmp.lt.s32.totalorder %s839, 47
        %s841 = scalar_select %p840, %s839, 47
        %s842 = smul.addr %s841, 8
        %s843 = scalar_lea.vmem %s5, %s842
      $region56: #{_autoencoder_forward_impl.1} parent=51 // pred_fallthru
        _
      // Predicated region
      $region57: #{_autoencoder_forward_impl.1} parent=51 // pred_check
        %p844 = pneg %p178
      $region58: #{_autoencoder_forward_impl.1} parent=51 // pred_check_branch
        %846 = sbr.rel (%p844) target = $region60
      $region59: #{_autoencoder_forward_impl.1} parent=51 // pred_region
        %s847 = smul.u32 16, %s19
        %p848 = scmp.lt.s32.totalorder %s847, 47
        %s849 = scalar_select %p848, %s847, 47
        %s850 = smul.addr %s849, 8
        %s851 = scalar_lea.vmem %s6, %s850
      $region60: #{_autoencoder_forward_impl.1} parent=51 // pred_fallthru
        _
    $region52: #{_autoencoder_forward_impl.1} parent=5 // pred_fallthru
      _
  $region6: #{_autoencoder_forward_impl.1} parent=0 // loop_footer
    %s17 = sadd.s32 1, %s13
  $region7: #{_autoencoder_forward_impl.1} parent=0 // loop_footer_branch
    %12 = sbr.rel target = $region3
  $region8: #{_autoencoder_forward_impl.1} parent=0 // loop_exit
    _

// kernel: _autoencoder_forward_impl.1
$region0: #{_autoencoder_forward_impl.1}
  #allocation0 [shape = 'u32[]', space=smem, size = 0x4, offset = 0x4, fixed_abs, tag = 'smem constant byte address 0x4 - core index']
  #allocation1 [shape = 'u32[144,128]{1,0:T(1,128)}', space=vmem, size = 0x12000, scoped, tag = 'internal scratch']
  %s0 = inlined_call_operand.vmem [shape: f32[384,128], index: 0, kind: input, shape index: {}]
  %s1 = inlined_call_operand.vmem [shape: f32[128,128], index: 1, kind: input, shape index: {}]
  %s2 = inlined_call_operand.vmem [shape: f32[1,128], index: 2, kind: input, shape index: {}]
  %s3 = inlined_call_operand.vmem [shape: f32[128,128], index: 3, kind: input, shape index: {}]
  %s4 = inlined_call_operand.vmem [shape: f32[1,128], index: 4, kind: input, shape index: {}]
  %s5 = inlined_call_operand.vmem [shape: f32[384,128], index: 5, kind: output, shape index: {0}]
  %s6 = inlined_call_operand.vmem [shape: f32[384,128], index: 6, kind: output, shape index: {1}]
  %7 = xla_tuple %s5, %s6
  %s8 = sld [smem:[#allocation0]]
  $region61: #{_autoencoder_forward_impl.1} parent=0
    _
  %s10 = ssub.s32 1, %s8
  %s11 = scalar_select 0, %s10, %s8
  loop: start=0, step=1, limit=5
  $region2: #{_autoencoder_forward_impl.1} parent=0 // loop_pre_header
    _
  $region3: #{_autoencoder_forward_impl.1} parent=0 // loop_header
    %s13 = sphi 0, %s17
    %p14 = scmp.ge.s32.totalorder %s13, 5
    %s23 = sphi 0, %s25
    %s26 = sphi 0, %s23
    %s27 = sphi 0, %s26
    %s43 = sphi 0, %s27
    %s47 = sphi 0, %s47
    %s49 = sphi 0, %s47
    %s50 = sphi 0, %s49
    %s64 = sphi 0, %s50
    %s68 = sphi 0, %s68
    %s70 = sphi 0, %s68
    %s71 = sphi 0, %s70
    %s85 = sphi 0, %s71
    %s89 = sphi 0, %s89
    %s91 = sphi 0, %s89
    %s92 = sphi 0, %s91
    %s106 = sphi 0, %s92
    %s110 = sphi 0, %s110
    %s112 = sphi 0, %s110
    %s113 = sphi 0, %s112
    %s127 = sphi 0, %s113
    %s133 = sphi 0, %s135
    %s136 = sphi 0, %s133
    %s137 = sphi 0, %s136
    %s153 = sphi 0, %s137
    %s159 = sphi 0, %s161
    %s162 = sphi 0, %s159
    %s163 = sphi 0, %s162
    %s179 = sphi 0, %s163
  $region4: #{_autoencoder_forward_impl.1} parent=0 // loop_header_branch
    %16 = sbr.rel (%p14) target = $region8
  $region5: #{_autoencoder_forward_impl.1} parent=0 // loop_body
    %s18 = ssub.s32 %s13, 1
    %s19 = ssub.s32 %s13, 2
    %s20 = sadd.s32 %s13, 1
    %s21 = ssub.s32 %s13, %s20
    %p22 = scmp.eq.s32.totalorder %s21, 0
    %s24 = sadd.s32 %s23, 1
    %s25 = scalar_select %p22, %s23, %s24
    %p28 = pneg %p22
    %p29 = scmp.eq.s32.totalorder %s13, 2
    %p30 = por %p28, %p29
    %p31 = scmp.ne.s32.totalorder %s23, %s26
    %p32 = scmp.eq.s32.totalorder %s13, 0
    %p33 = por %p31, %p32
    %p34 = scmp.ne.s32.totalorder %s23, %s26
    %p35 = scmp.eq.s32.totalorder %s18, 2
    %p36 = por %p34, %p35
    %p37 = scmp.ne.s32.totalorder %s26, %s27
    %p38 = scmp.eq.s32.totalorder %s18, 0
    %p39 = por %p37, %p38
    %p40 = scmp.ne.s32.totalorder %s26, %s27
    %p41 = scmp.eq.s32.totalorder %s19, 2
    %p42 = por %p40, %p41
    %p44 = scmp.ne.s32.totalorder %s27, %s43
    %p45 = scmp.eq.s32.totalorder %s19, 0
    %p46 = por %p44, %p45
    %s48 = sadd.s32 %s47, 1
    %p51 = scmp.eq.s32.totalorder %s13, 2
    %p52 = scmp.ne.s32.totalorder %s47, %s49
    %p53 = scmp.eq.s32.totalorder %s13, 0
    %p54 = por %p52, %p53
    %p55 = scmp.ne.s32.totalorder %s47, %s49
    %p56 = scmp.eq.s32.totalorder %s18, 2
    %p57 = por %p55, %p56
    %p58 = scmp.ne.s32.totalorder %s49, %s50
    %p59 = scmp.eq.s32.totalorder %s18, 0
    %p60 = por %p58, %p59
    %p61 = scmp.ne.s32.totalorder %s49, %s50
    %p62 = scmp.eq.s32.totalorder %s19, 2
    %p63 = por %p61, %p62
    %p65 = scmp.ne.s32.totalorder %s50, %s64
    %p66 = scmp.eq.s32.totalorder %s19, 0
    %p67 = por %p65, %p66
    %s69 = sadd.s32 %s68, 1
    %p72 = scmp.eq.s32.totalorder %s13, 2
    %p73 = scmp.ne.s32.totalorder %s68, %s70
    %p74 = scmp.eq.s32.totalorder %s13, 0
    %p75 = por %p73, %p74
    %p76 = scmp.ne.s32.totalorder %s68, %s70
    %p77 = scmp.eq.s32.totalorder %s18, 2
    %p78 = por %p76, %p77
    %p79 = scmp.ne.s32.totalorder %s70, %s71
    %p80 = scmp.eq.s32.totalorder %s18, 0
    %p81 = por %p79, %p80
    %p82 = scmp.ne.s32.totalorder %s70, %s71
    %p83 = scmp.eq.s32.totalorder %s19, 2
    %p84 = por %p82, %p83
    %p86 = scmp.ne.s32.totalorder %s71, %s85
    %p87 = scmp.eq.s32.totalorder %s19, 0
    %p88 = por %p86, %p87
    %s90 = sadd.s32 %s89, 1
    %p93 = scmp.eq.s32.totalorder %s13, 2
    %p94 = scmp.ne.s32.totalorder %s89, %s91
    %p95 = scmp.eq.s32.totalorder %s13, 0
    %p96 = por %p94, %p95
    %p97 = scmp.ne.s32.totalorder %s89, %s91
    %p98 = scmp.eq.s32.totalorder %s18, 2
    %p99 = por %p97, %p98
    %p100 = scmp.ne.s32.totalorder %s91, %s92
    %p101 = scmp.eq.s32.totalorder %s18, 0
    %p102 = por %p100, %p101
    %p103 = scmp.ne.s32.totalorder %s91, %s92
    %p104 = scmp.eq.s32.totalorder %s19, 2
    %p105 = por %p103, %p104
    %p107 = scmp.ne.s32.totalorder %s92, %s106
    %p108 = scmp.eq.s32.totalorder %s19, 0
    %p109 = por %p107, %p108
    %s111 = sadd.s32 %s110, 1
    %p114 = scmp.eq.s32.totalorder %s13, 2
    %p115 = scmp.ne.s32.totalorder %s110, %s112
    %p116 = scmp.eq.s32.totalorder %s13, 0
    %p117 = por %p115, %p116
    %p118 = scmp.ne.s32.totalorder %s110, %s112
    %p119 = scmp.eq.s32.totalorder %s18, 2
    %p120 = por %p118, %p119
    %p121 = scmp.ne.s32.totalorder %s112, %s113
    %p122 = scmp.eq.s32.totalorder %s18, 0
    %p123 = por %p121, %p122
    %p124 = scmp.ne.s32.totalorder %s112, %s113
    %p125 = scmp.eq.s32.totalorder %s19, 2
    %p126 = por %p124, %p125
    %p128 = scmp.ne.s32.totalorder %s113, %s127
    %p129 = scmp.eq.s32.totalorder %s19, 0
    %p130 = por %p128, %p129
    %s131 = ssub.s32 %s13, %s20
    %p132 = scmp.eq.s32.totalorder %s131, 0
    %s134 = sadd.s32 %s133, 1
    %s135 = scalar_select %p132, %s133, %s134
    %p138 = pneg %p132
    %p139 = scmp.eq.s32.totalorder %s13, 2
    %p140 = por %p138, %p139
    %p141 = scmp.ne.s32.totalorder %s133, %s136
    %p142 = scmp.eq.s32.totalorder %s13, 0
    %p143 = por %p141, %p142
    %p144 = scmp.ne.s32.totalorder %s133, %s136
    %p145 = scmp.eq.s32.totalorder %s18, 2
    %p146 = por %p144, %p145
    %p147 = scmp.ne.s32.totalorder %s136, %s137
    %p148 = scmp.eq.s32.totalorder %s18, 0
    %p149 = por %p147, %p148
    %p150 = scmp.ne.s32.totalorder %s136, %s137
    %p151 = scmp.eq.s32.totalorder %s19, 2
    %p152 = por %p150, %p151
    %p154 = scmp.ne.s32.totalorder %s137, %s153
    %p155 = scmp.eq.s32.totalorder %s19, 0
    %p156 = por %p154, %p155
    %s157 = ssub.s32 %s13, %s20
    %p158 = scmp.eq.s32.totalorder %s157, 0
    %s160 = sadd.s32 %s159, 1
    %s161 = scalar_select %p158, %s159, %s160
    %p164 = pneg %p158
    %p165 = scmp.eq.s32.totalorder %s13, 2
    %p166 = por %p164, %p165
    %p167 = scmp.ne.s32.totalorder %s159, %s162
    %p168 = scmp.eq.s32.totalorder %s13, 0
    %p169 = por %p167, %p168
    %p170 = scmp.ne.s32.totalorder %s159, %s162
    %p171 = scmp.eq.s32.totalorder %s18, 2
    %p172 = por %p170, %p171
    %p173 = scmp.ne.s32.totalorder %s162, %s163
    %p174 = scmp.eq.s32.totalorder %s18, 0
    %p175 = por %p173, %p174
    %p176 = scmp.ne.s32.totalorder %s162, %s163
    %p177 = scmp.eq.s32.totalorder %s19, 2
    %p178 = por %p176, %p177
    %p180 = scmp.ne.s32.totalorder %s163, %s179
    %p181 = scmp.eq.s32.totalorder %s19, 0
    %p182 = por %p180, %p181
    %p183 = scmp.le.s32.totalorder 1, %s13
    %p184 = scmp.lt.s32.totalorder %s13, 4
    %p185 = pnand %p183, %p184
    %p186 = pneg %p185
    // Predicated region
    $region9: #{_autoencoder_forward_impl.1} parent=5 // pred_check
      _
    $region10: #{_autoencoder_forward_impl.1} parent=5 // pred_check_branch
      %188 = sbr.rel (%p185) target = $region12
    $region11: #{_autoencoder_forward_impl.1} parent=5 // pred_region
      %s189 = ssub.s32 %s13, 1
      // Predicated region
      $region13: #{_autoencoder_forward_impl.1} parent=11 // pred_check
        %p190 = pneg %p60
      $region14: #{_autoencoder_forward_impl.1} parent=11 // pred_check_branch
        %192 = sbr.rel (%p190) target = $region16
      $region15: #{_autoencoder_forward_impl.1} parent=11 // pred_region
        _
      $region16: #{_autoencoder_forward_impl.1} parent=11 // pred_fallthru
        _
      // Predicated region
      $region17: #{_autoencoder_forward_impl.1} parent=11 // pred_check
        %p193 = pneg %p81
      $region18: #{_autoencoder_forward_impl.1} parent=11 // pred_check_branch
        %195 = sbr.rel (%p193) target = $region20
      $region19: #{_autoencoder_forward_impl.1} parent=11 // pred_region
        _
      $region20: #{_autoencoder_forward_impl.1} parent=11 // pred_fallthru
        _
      // Predicated region
      $region21: #{_autoencoder_forward_impl.1} parent=11 // pred_check
        %p196 = pneg %p102
      $region22: #{_autoencoder_forward_impl.1} parent=11 // pred_check_branch
        %198 = sbr.rel (%p196) target = $region24
      $region23: #{_autoencoder_forward_impl.1} parent=11 // pred_region
        _
      $region24: #{_autoencoder_forward_impl.1} parent=11 // pred_fallthru
        _
      // Predicated region
      $region25: #{_autoencoder_forward_impl.1} parent=11 // pred_check
        %p199 = pneg %p123
      $region26: #{_autoencoder_forward_impl.1} parent=11 // pred_check_branch
        %201 = sbr.rel (%p199) target = $region28
      $region27: #{_autoencoder_forward_impl.1} parent=11 // pred_region
        _
      $region28: #{_autoencoder_forward_impl.1} parent=11 // pred_fallthru
        _
    $region12: #{_autoencoder_forward_impl.1} parent=5 // pred_fallthru
      _
    %p202 = scmp.lt.s32.totalorder %s13, 3
    // Predicated region
    $region29: #{_autoencoder_forward_impl.1} parent=5 // pred_check
      %p203 = pneg %p202
    $region30: #{_autoencoder_forward_impl.1} parent=5 // pred_check_branch
      %205 = sbr.rel (%p203) target = $region32
    $region31: #{_autoencoder_forward_impl.1} parent=5 // pred_region
      // Predicated region
      $region33: #{_autoencoder_forward_impl.1} parent=31 // pred_check
        %p206 = pneg %p33
      $region34: #{_autoencoder_forward_impl.1} parent=31 // pred_check_branch
        %208 = sbr.rel (%p206) target = $region36
      $region35: #{_autoencoder_forward_impl.1} parent=31 // pred_region
        %s209 = smul.u32 16, %s13
        %p210 = scmp.lt.s32.totalorder %s209, 47
        %s211 = scalar_select %p210, %s209, 47
        %s212 = smul.addr %s211, 8
        %s213 = scalar_lea.vmem %s0, %s212
        %s214 = smul.u32 16, %s13
      $region36: #{_autoencoder_forward_impl.1} parent=31 // pred_fallthru
        _
    $region32: #{_autoencoder_forward_impl.1} parent=5 // pred_fallthru
      _
    %p215 = scmp.le.s32.totalorder 1, %s13
    %p216 = scmp.lt.s32.totalorder %s13, 4
    %p217 = pnand %p215, %p216
    %p218 = pneg %p217
    // Predicated region
    $region37: #{_autoencoder_forward_impl.1} parent=5 // pred_check
      _
    $region38: #{_autoencoder_forward_impl.1} parent=5 // pred_check_branch
      %220 = sbr.rel (%p217) target = $region40
    $region39: #{_autoencoder_forward_impl.1} parent=5 // pred_region
      %s221 = ssub.s32 %s13, 1
      %s222 = smul.u32 16, %s18
      %p223 = scmp.lt.s32.totalorder %s222, 47
      %s224 = scalar_select %p223, %s222, 47
      %s225 = smul.addr %s224, 8
      %s226 = scalar_lea.vmem %s0, %s225
      %p227 = pneg %p39
      %p228 = pneg %p36
      %p229 = pneg %p60
      %p230 = pneg %p57
      %p231 = pneg %p81
      %p232 = pneg %p78
      %p233 = pneg %p102
      %p234 = pneg %p99
      %p235 = pneg %p123
      %p236 = pneg %p120
      %p237 = pneg %p149
      %p238 = pneg %p146
      %s239 = smul.u32 16, %s18
      %p240 = scmp.lt.s32.totalorder %s239, 47
      %s241 = scalar_select %p240, %s239, 47
      %s242 = smul.addr %s241, 8
      %s243 = scalar_lea.vmem %s5, %s242
      %p244 = pneg %p175
      %p245 = pneg %p172
      %s246 = smul.u32 16, %s18
      %p247 = scmp.lt.s32.totalorder %s246, 47
      %s248 = scalar_select %p247, %s246, 47
      %s249 = smul.addr %s248, 8
      %s250 = scalar_lea.vmem %s6, %s249
      %s251 = smul.u32 16, %s18
      %p252 = scmp.lt.s32.totalorder %s251, 47
      %s253 = scalar_select %p252, %s251, 47
      %s254 = smul.addr %s253, 8
      %s255 = scalar_lea.vmem %s0, %s254
      %s256 = smul.u32 16, %s18
      %s257 = smul.u32 16, %s18
      %p258 = scmp.lt.s32.totalorder %s257, 47
      %s259 = scalar_select %p258, %s257, 47
      %s260 = smul.addr %s259, 8
      %s261 = scalar_lea.vmem %s5, %s260
      %s262 = smul.u32 16, %s18
      %s263 = smul.u32 16, %s18
      %p264 = scmp.lt.s32.totalorder %s263, 47
      %s265 = scalar_select %p264, %s263, 47
      %s266 = smul.addr %s265, 8
      %s267 = scalar_lea.vmem %s6, %s266
      %s268 = smul.u32 16, %s18
      %v269 = vld [vmem:[%s255] sm:$0xff]
      %v270 = vld [vmem:[%s255 + $0x8] sm:$0xff]
      %v271 = vld [vmem:[%s255 + $0x10] sm:$0xff]
      %v272 = vld [vmem:[%s255 + $0x18] sm:$0xff]
      %v273 = vld [vmem:[%s255 + $0x20] sm:$0xff]
      %v274 = vld [vmem:[%s255 + $0x28] sm:$0xff]
      %v275 = vld [vmem:[%s255 + $0x30] sm:$0xff]
      %v276 = vld [vmem:[%s255 + $0x38] sm:$0xff]
      %v277 = vld [vmem:[%s255 + $0x40] sm:$0xff]
      %v278 = vld [vmem:[%s255 + $0x48] sm:$0xff]
      %v279 = vld [vmem:[%s255 + $0x50] sm:$0xff]
      %v280 = vld [vmem:[%s255 + $0x58] sm:$0xff]
      %v281 = vld [vmem:[%s255 + $0x60] sm:$0xff]
      %v282 = vld [vmem:[%s255 + $0x68] sm:$0xff]
      %v283 = vld [vmem:[%s255 + $0x70] sm:$0xff]
      %v284 = vld [vmem:[%s255 + $0x78] sm:$0xff]
      %v285 = vld [vmem:[%s1] sm:$0xff]
      %v286 = vld [vmem:[%s1 + $0x8] sm:$0xff]
      %v287 = vld [vmem:[%s1 + $0x10] sm:$0xff]
      %v288 = vld [vmem:[%s1 + $0x18] sm:$0xff]
      %v289 = vld [vmem:[%s1 + $0x20] sm:$0xff]
      %v290 = vld [vmem:[%s1 + $0x28] sm:$0xff]
      %v291 = vld [vmem:[%s1 + $0x30] sm:$0xff]
      %v292 = vld [vmem:[%s1 + $0x38] sm:$0xff]
      %v293 = vld [vmem:[%s1 + $0x40] sm:$0xff]
      %v294 = vld [vmem:[%s1 + $0x48] sm:$0xff]
      %v295 = vld [vmem:[%s1 + $0x50] sm:$0xff]
      %v296 = vld [vmem:[%s1 + $0x58] sm:$0xff]
      %v297 = vld [vmem:[%s1 + $0x60] sm:$0xff]
      %v298 = vld [vmem:[%s1 + $0x68] sm:$0xff]
      %v299 = vld [vmem:[%s1 + $0x70] sm:$0xff]
      %v300 = vld [vmem:[%s1 + $0x78] sm:$0xff]
      %v301 = vld [vmem:[%s2] sm:$0x1]
      %v303 = vlaneseq
      %v304 = vshrl.u32 %v303, 7
      %v305 = vsub.s32 0, %v304
      %v306 = vrot.slane %v301, %v305
      %308 = vmatprep.subr.mxu0 0.0
      %309 = vmatpush1.msra.mxu0 %v300
      %310 = vmatprep.subr.mxu0 0.0
      %311 = vmatpush1.msra.mxu0 %v299
      %312 = vmatprep.subr.mxu0 0.0
      %313 = vmatpush1.msra.mxu0 %v298
      %314 = vmatprep.subr.mxu0 0.0
      %315 = vmatpush1.msra.mxu0 %v297
      %316 = vmatprep.subr.mxu0 0.0
      %317 = vmatpush1.msra.mxu0 %v296
      %318 = vmatprep.subr.mxu0 0.0
      %319 = vmatpush1.msra.mxu0 %v295
      %320 = vmatprep.subr.mxu0 0.0
      %321 = vmatpush1.msra.mxu0 %v294
      %322 = vmatprep.subr.mxu0 0.0
      %323 = vmatpush1.msra.mxu0 %v293
      %324 = vmatprep.subr.mxu0 0.0
      %325 = vmatpush1.msra.mxu0 %v292
      %326 = vmatprep.subr.mxu0 0.0
      %327 = vmatpush1.msra.mxu0 %v291
      %328 = vmatprep.subr.mxu0 0.0
      %329 = vmatpush1.msra.mxu0 %v290
      %330 = vmatprep.subr.mxu0 0.0
      %331 = vmatpush1.msra.mxu0 %v289
      %332 = vmatprep.subr.mxu0 0.0
      %333 = vmatpush1.msra.mxu0 %v288
      %334 = vmatprep.subr.mxu0 0.0
      %335 = vmatpush1.msra.mxu0 %v287
      %336 = vmatprep.subr.mxu0 0.0
      %337 = vmatpush1.msra.mxu0 %v286
      %338 = vmatprep.subr.mxu0 0.0
      %339 = vmatpush1.msra.mxu0 %v285
      %340 = vmatprep.subr.mxu0 0.0
      %341 = vmatpush2.msra.mxu0 0.0
      %342 = vmatprep.subr.mxu0 0.0
      %343 = vmatpush2.msra.mxu0 0.0
      %344 = vmatprep.subr.mxu0 0.0
      %345 = vmatpush2.msra.mxu0 0.0
      %346 = vmatprep.subr.mxu0 0.0
      %347 = vmatpush2.msra.mxu0 0.0
      %348 = vmatprep.subr.mxu0 0.0
      %349 = vmatpush2.msra.mxu0 0.0
      %350 = vmatprep.subr.mxu0 0.0
      %351 = vmatpush2.msra.mxu0 0.0
      %352 = vmatprep.subr.mxu0 0.0
      %353 = vmatpush2.msra.mxu0 0.0
      %354 = vmatprep.subr.mxu0 0.0
      %355 = vmatpush2.msra.mxu0 0.0
      %356 = vmatprep.subr.mxu0 0.0
      %357 = vmatpush2.msra.mxu0 0.0
      %358 = vmatprep.subr.mxu0 0.0
      %359 = vmatpush2.msra.mxu0 0.0
      %360 = vmatprep.subr.mxu0 0.0
      %361 = vmatpush2.msra.mxu0 0.0
      %362 = vmatprep.subr.mxu0 0.0
      %363 = vmatpush2.msra.mxu0 0.0
      %364 = vmatprep.subr.mxu0 0.0
      %365 = vmatpush2.msra.mxu0 0.0
      %366 = vmatprep.subr.mxu0 0.0
      %367 = vmatpush2.msra.mxu0 0.0
      %368 = vmatprep.subr.mxu0 0.0
      %369 = vmatpush2.msra.mxu0 0.0
      %370 = vmatprep.subr.mxu0 0.0
      %371 = vmatpush2.msra.mxu0 0.0
      %372 = vmatprep.mubr.f32.mxu0 0.0
      %373 = vmatmul.mubr.f32.gmra.mxu0 %v269
      %v374 = vpop.f32.mrf.mxu0
      %v375 = vadd.f32 %v306, %v374
      %v376 = vpop.f32.mrf.mxu0
      %377 = vmatprep.mubr.f32.mxu0 0.0
      %378 = vmatmul.mubr.f32.gmra.mxu0 %v270
      %v379 = vpop.f32.mrf.mxu0
      %v380 = vadd.f32 %v306, %v379
      %v381 = vpop.f32.mrf.mxu0
      %382 = vmatprep.mubr.f32.mxu0 0.0
      %383 = vmatmul.mubr.f32.gmra.mxu0 %v271
      %v384 = vpop.f32.mrf.mxu0
      %v385 = vadd.f32 %v306, %v384
      %v386 = vpop.f32.mrf.mxu0
      %387 = vmatprep.mubr.f32.mxu0 0.0
      %388 = vmatmul.mubr.f32.gmra.mxu0 %v272
      %v389 = vpop.f32.mrf.mxu0
      %v390 = vadd.f32 %v306, %v389
      %v391 = vpop.f32.mrf.mxu0
      %392 = vmatprep.mubr.f32.mxu0 0.0
      %393 = vmatmul.mubr.f32.gmra.mxu0 %v273
      %v394 = vpop.f32.mrf.mxu0
      %v395 = vadd.f32 %v306, %v394
      %v396 = vpop.f32.mrf.mxu0
      %397 = vmatprep.mubr.f32.mxu0 0.0
      %398 = vmatmul.mubr.f32.gmra.mxu0 %v274
      %v399 = vpop.f32.mrf.mxu0
      %v400 = vadd.f32 %v306, %v399
      %v401 = vpop.f32.mrf.mxu0
      %402 = vmatprep.mubr.f32.mxu0 0.0
      %403 = vmatmul.mubr.f32.gmra.mxu0 %v275
      %v404 = vpop.f32.mrf.mxu0
      %v405 = vadd.f32 %v306, %v404
      %v406 = vpop.f32.mrf.mxu0
      %407 = vmatprep.mubr.f32.mxu0 0.0
      %408 = vmatmul.mubr.f32.gmra.mxu0 %v276
      %v409 = vpop.f32.mrf.mxu0
      %v410 = vadd.f32 %v306, %v409
      %v411 = vpop.f32.mrf.mxu0
      %412 = vmatprep.mubr.f32.mxu0 0.0
      %413 = vmatmul.mubr.f32.gmra.mxu0 %v277
      %v414 = vpop.f32.mrf.mxu0
      %v415 = vadd.f32 %v306, %v414
      %v416 = vpop.f32.mrf.mxu0
      %417 = vmatprep.mubr.f32.mxu0 0.0
      %418 = vmatmul.mubr.f32.gmra.mxu0 %v278
      %v419 = vpop.f32.mrf.mxu0
      %v420 = vadd.f32 %v306, %v419
      %v421 = vpop.f32.mrf.mxu0
      %422 = vmatprep.mubr.f32.mxu0 0.0
      %423 = vmatmul.mubr.f32.gmra.mxu0 %v279
      %v424 = vpop.f32.mrf.mxu0
      %v425 = vadd.f32 %v306, %v424
      %v426 = vpop.f32.mrf.mxu0
      %427 = vmatprep.mubr.f32.mxu0 0.0
      %428 = vmatmul.mubr.f32.gmra.mxu0 %v280
      %v429 = vpop.f32.mrf.mxu0
      %v430 = vadd.f32 %v306, %v429
      %v431 = vpop.f32.mrf.mxu0
      %432 = vmatprep.mubr.f32.mxu0 0.0
      %433 = vmatmul.mubr.f32.gmra.mxu0 %v281
      %v434 = vpop.f32.mrf.mxu0
      %v435 = vadd.f32 %v306, %v434
      %v436 = vpop.f32.mrf.mxu0
      %437 = vmatprep.mubr.f32.mxu0 0.0
      %438 = vmatmul.mubr.f32.gmra.mxu0 %v282
      %v439 = vpop.f32.mrf.mxu0
      %v440 = vadd.f32 %v306, %v439
      %v441 = vpop.f32.mrf.mxu0
      %442 = vmatprep.mubr.f32.mxu0 0.0
      %443 = vmatmul.mubr.f32.gmra.mxu0 %v283
      %v444 = vpop.f32.mrf.mxu0
      %v445 = vadd.f32 %v306, %v444
      %v446 = vpop.f32.mrf.mxu0
      %447 = vmatprep.mubr.f32.mxu0 0.0
      %448 = vmatmul.mubr.f32.gmra.mxu0 %v284
      %v449 = vpop.f32.mrf.mxu0
      %v450 = vadd.f32 %v306, %v449
      %v451 = vpop.f32.mrf.mxu0
      %452 = vdwg.mxu0
      %v453 = vsub.f32 0.0, %v375
      %v454 = vsub.f32 0.0, %v380
      %v455 = vsub.f32 0.0, %v385
      %v456 = vsub.f32 0.0, %v390
      %v457 = vsub.f32 0.0, %v395
      %v458 = vsub.f32 0.0, %v400
      %v459 = vsub.f32 0.0, %v405
      %v460 = vsub.f32 0.0, %v410
      %v461 = vsub.f32 0.0, %v415
      %v462 = vsub.f32 0.0, %v420
      %v463 = vsub.f32 0.0, %v425
      %v464 = vsub.f32 0.0, %v430
      %v465 = vsub.f32 0.0, %v435
      %v466 = vsub.f32 0.0, %v440
      %v467 = vsub.f32 0.0, %v445
      %v468 = vsub.f32 0.0, %v450
      %v469 = vmul.f32 %v453, 1.442695
      %v470 = vpow.pop %v469
      %v471 = vmul.f32 %v454, 1.442695
      %v472 = vpow.pop %v471
      %v473 = vmul.f32 %v455, 1.442695
      %v474 = vpow.pop %v473
      %v475 = vmul.f32 %v456, 1.442695
      %v476 = vpow.pop %v475
      %v477 = vmul.f32 %v457, 1.442695
      %v478 = vpow.pop %v477
      %v479 = vmul.f32 %v458, 1.442695
      %v480 = vpow.pop %v479
      %v481 = vmul.f32 %v459, 1.442695
      %v482 = vpow.pop %v481
      %v483 = vmul.f32 %v460, 1.442695
      %v484 = vpow.pop %v483
      %v485 = vmul.f32 %v461, 1.442695
      %v486 = vpow.pop %v485
      %v487 = vmul.f32 %v462, 1.442695
      %v488 = vpow.pop %v487
      %v489 = vmul.f32 %v463, 1.442695
      %v490 = vpow.pop %v489
      %v491 = vmul.f32 %v464, 1.442695
      %v492 = vpow.pop %v491
      %v493 = vmul.f32 %v465, 1.442695
      %v494 = vpow.pop %v493
      %v495 = vmul.f32 %v466, 1.442695
      %v496 = vpow.pop %v495
      %v497 = vmul.f32 %v467, 1.442695
      %v498 = vpow.pop %v497
      %v499 = vmul.f32 %v468, 1.442695
      %v500 = vpow.pop %v499
      %v501 = vadd.f32 %v470, 1.0
      %v502 = vadd.f32 %v472, 1.0
      %v503 = vadd.f32 %v474, 1.0
      %v504 = vadd.f32 %v476, 1.0
      %v505 = vadd.f32 %v478, 1.0
      %v506 = vadd.f32 %v480, 1.0
      %v507 = vadd.f32 %v482, 1.0
      %v508 = vadd.f32 %v484, 1.0
      %v509 = vadd.f32 %v486, 1.0
      %v510 = vadd.f32 %v488, 1.0
      %v511 = vadd.f32 %v490, 1.0
      %v512 = vadd.f32 %v492, 1.0
      %v513 = vadd.f32 %v494, 1.0
      %v514 = vadd.f32 %v496, 1.0
      %v515 = vadd.f32 %v498, 1.0
      %v516 = vadd.f32 %v500, 1.0
      %v517 = vrcp.pop %v501
      %v518 = vrcp.pop %v502
      %v519 = vrcp.pop %v503
      %v520 = vrcp.pop %v504
      %v521 = vrcp.pop %v505
      %v522 = vrcp.pop %v506
      %v523 = vrcp.pop %v507
      %v524 = vrcp.pop %v508
      %v525 = vrcp.pop %v509
      %v526 = vrcp.pop %v510
      %v527 = vrcp.pop %v511
      %v528 = vrcp.pop %v512
      %v529 = vrcp.pop %v513
      %v530 = vrcp.pop %v514
      %v531 = vrcp.pop %v515
      %v532 = vrcp.pop %v516
      %533 = vst [vmem:[%s267] sm:$0xff] %v517
      %534 = vst [vmem:[%s267 + $0x8] sm:$0xff] %v518
      %535 = vst [vmem:[%s267 + $0x10] sm:$0xff] %v519
      %536 = vst [vmem:[%s267 + $0x18] sm:$0xff] %v520
      %537 = vst [vmem:[%s267 + $0x20] sm:$0xff] %v521
      %538 = vst [vmem:[%s267 + $0x28] sm:$0xff] %v522
      %539 = vst [vmem:[%s267 + $0x30] sm:$0xff] %v523
      %540 = vst [vmem:[%s267 + $0x38] sm:$0xff] %v524
      %541 = vst [vmem:[%s267 + $0x40] sm:$0xff] %v525
      %542 = vst [vmem:[%s267 + $0x48] sm:$0xff] %v526
      %543 = vst [vmem:[%s267 + $0x50] sm:$0xff] %v527
      %544 = vst [vmem:[%s267 + $0x58] sm:$0xff] %v528
      %545 = vst [vmem:[%s267 + $0x60] sm:$0xff] %v529
      %546 = vst [vmem:[%s267 + $0x68] sm:$0xff] %v530
      %547 = vst [vmem:[%s267 + $0x70] sm:$0xff] %v531
      %548 = vst [vmem:[%s267 + $0x78] sm:$0xff] %v532
      %v549 = vld [vmem:[%s3] sm:$0xff]
      %v550 = vld [vmem:[%s3 + $0x8] sm:$0xff]
      %v551 = vld [vmem:[%s3 + $0x10] sm:$0xff]
      %v552 = vld [vmem:[%s3 + $0x18] sm:$0xff]
      %v553 = vld [vmem:[%s3 + $0x20] sm:$0xff]
      %v554 = vld [vmem:[%s3 + $0x28] sm:$0xff]
      %v555 = vld [vmem:[%s3 + $0x30] sm:$0xff]
      %v556 = vld [vmem:[%s3 + $0x38] sm:$0xff]
      %v557 = vld [vmem:[%s3 + $0x40] sm:$0xff]
      %v558 = vld [vmem:[%s3 + $0x48] sm:$0xff]
      %v559 = vld [vmem:[%s3 + $0x50] sm:$0xff]
      %v560 = vld [vmem:[%s3 + $0x58] sm:$0xff]
      %v561 = vld [vmem:[%s3 + $0x60] sm:$0xff]
      %v562 = vld [vmem:[%s3 + $0x68] sm:$0xff]
      %v563 = vld [vmem:[%s3 + $0x70] sm:$0xff]
      %v564 = vld [vmem:[%s3 + $0x78] sm:$0xff]
      %v565 = vld [vmem:[%s4] sm:$0x1]
      %v567 = vlaneseq
      %v568 = vshrl.u32 %v567, 7
      %v569 = vsub.s32 0, %v568
      %v570 = vrot.slane %v565, %v569
      %572 = vmatprep.subr.mxu0 0.0
      %573 = vmatpush1.msra.mxu0 %v564
      %574 = vmatprep.subr.mxu0 0.0
      %575 = vmatpush1.msra.mxu0 %v563
      %576 = vmatprep.subr.mxu0 0.0
      %577 = vmatpush1.msra.mxu0 %v562
      %578 = vmatprep.subr.mxu0 0.0
      %579 = vmatpush1.msra.mxu0 %v561
      %580 = vmatprep.subr.mxu0 0.0
      %581 = vmatpush1.msra.mxu0 %v560
      %582 = vmatprep.subr.mxu0 0.0
      %583 = vmatpush1.msra.mxu0 %v559
      %584 = vmatprep.subr.mxu0 0.0
      %585 = vmatpush1.msra.mxu0 %v558
      %586 = vmatprep.subr.mxu0 0.0
      %587 = vmatpush1.msra.mxu0 %v557
      %588 = vmatprep.subr.mxu0 0.0
      %589 = vmatpush1.msra.mxu0 %v556
      %590 = vmatprep.subr.mxu0 0.0
      %591 = vmatpush1.msra.mxu0 %v555
      %592 = vmatprep.subr.mxu0 0.0
      %593 = vmatpush1.msra.mxu0 %v554
      %594 = vmatprep.subr.mxu0 0.0
      %595 = vmatpush1.msra.mxu0 %v553
      %596 = vmatprep.subr.mxu0 0.0
      %597 = vmatpush1.msra.mxu0 %v552
      %598 = vmatprep.subr.mxu0 0.0
      %599 = vmatpush1.msra.mxu0 %v551
      %600 = vmatprep.subr.mxu0 0.0
      %601 = vmatpush1.msra.mxu0 %v550
      %602 = vmatprep.subr.mxu0 0.0
      %603 = vmatpush1.msra.mxu0 %v549
      %604 = vmatprep.subr.mxu0 0.0
      %605 = vmatpush2.msra.mxu0 0.0
      %606 = vmatprep.subr.mxu0 0.0
      %607 = vmatpush2.msra.mxu0 0.0
      %608 = vmatprep.subr.mxu0 0.0
      %609 = vmatpush2.msra.mxu0 0.0
      %610 = vmatprep.subr.mxu0 0.0
      %611 = vmatpush2.msra.mxu0 0.0
      %612 = vmatprep.subr.mxu0 0.0
      %613 = vmatpush2.msra.mxu0 0.0
      %614 = vmatprep.subr.mxu0 0.0
      %615 = vmatpush2.msra.mxu0 0.0
      %616 = vmatprep.subr.mxu0 0.0
      %617 = vmatpush2.msra.mxu0 0.0
      %618 = vmatprep.subr.mxu0 0.0
      %619 = vmatpush2.msra.mxu0 0.0
      %620 = vmatprep.subr.mxu0 0.0
      %621 = vmatpush2.msra.mxu0 0.0
      %622 = vmatprep.subr.mxu0 0.0
      %623 = vmatpush2.msra.mxu0 0.0
      %624 = vmatprep.subr.mxu0 0.0
      %625 = vmatpush2.msra.mxu0 0.0
      %626 = vmatprep.subr.mxu0 0.0
      %627 = vmatpush2.msra.mxu0 0.0
      %628 = vmatprep.subr.mxu0 0.0
      %629 = vmatpush2.msra.mxu0 0.0
      %630 = vmatprep.subr.mxu0 0.0
      %631 = vmatpush2.msra.mxu0 0.0
      %632 = vmatprep.subr.mxu0 0.0
      %633 = vmatpush2.msra.mxu0 0.0
      %634 = vmatprep.subr.mxu0 0.0
      %635 = vmatpush2.msra.mxu0 0.0
      %636 = vmatprep.mubr.f32.mxu0 0.0
      %637 = vmatmul.mubr.f32.gmra.mxu0 %v517
      %v638 = vpop.f32.mrf.mxu0
      %v639 = vadd.f32 %v570, %v638
      %v640 = vpop.f32.mrf.mxu0
      %641 = vmatprep.mubr.f32.mxu0 0.0
      %642 = vmatmul.mubr.f32.gmra.mxu0 %v518
      %v643 = vpop.f32.mrf.mxu0
      %v644 = vadd.f32 %v570, %v643
      %v645 = vpop.f32.mrf.mxu0
      %646 = vmatprep.mubr.f32.mxu0 0.0
      %647 = vmatmul.mubr.f32.gmra.mxu0 %v519
      %v648 = vpop.f32.mrf.mxu0
      %v649 = vadd.f32 %v570, %v648
      %v650 = vpop.f32.mrf.mxu0
      %651 = vmatprep.mubr.f32.mxu0 0.0
      %652 = vmatmul.mubr.f32.gmra.mxu0 %v520
      %v653 = vpop.f32.mrf.mxu0
      %v654 = vadd.f32 %v570, %v653
      %v655 = vpop.f32.mrf.mxu0
      %656 = vmatprep.mubr.f32.mxu0 0.0
      %657 = vmatmul.mubr.f32.gmra.mxu0 %v521
      %v658 = vpop.f32.mrf.mxu0
      %v659 = vadd.f32 %v570, %v658
      %v660 = vpop.f32.mrf.mxu0
      %661 = vmatprep.mubr.f32.mxu0 0.0
      %662 = vmatmul.mubr.f32.gmra.mxu0 %v522
      %v663 = vpop.f32.mrf.mxu0
      %v664 = vadd.f32 %v570, %v663
      %v665 = vpop.f32.mrf.mxu0
      %666 = vmatprep.mubr.f32.mxu0 0.0
      %667 = vmatmul.mubr.f32.gmra.mxu0 %v523
      %v668 = vpop.f32.mrf.mxu0
      %v669 = vadd.f32 %v570, %v668
      %v670 = vpop.f32.mrf.mxu0
      %671 = vmatprep.mubr.f32.mxu0 0.0
      %672 = vmatmul.mubr.f32.gmra.mxu0 %v524
      %v673 = vpop.f32.mrf.mxu0
      %v674 = vadd.f32 %v570, %v673
      %v675 = vpop.f32.mrf.mxu0
      %676 = vmatprep.mubr.f32.mxu0 0.0
      %677 = vmatmul.mubr.f32.gmra.mxu0 %v525
      %v678 = vpop.f32.mrf.mxu0
      %v679 = vadd.f32 %v570, %v678
      %v680 = vpop.f32.mrf.mxu0
      %681 = vmatprep.mubr.f32.mxu0 0.0
      %682 = vmatmul.mubr.f32.gmra.mxu0 %v526
      %v683 = vpop.f32.mrf.mxu0
      %v684 = vadd.f32 %v570, %v683
      %v685 = vpop.f32.mrf.mxu0
      %686 = vmatprep.mubr.f32.mxu0 0.0
      %687 = vmatmul.mubr.f32.gmra.mxu0 %v527
      %v688 = vpop.f32.mrf.mxu0
      %v689 = vadd.f32 %v570, %v688
      %v690 = vpop.f32.mrf.mxu0
      %691 = vmatprep.mubr.f32.mxu0 0.0
      %692 = vmatmul.mubr.f32.gmra.mxu0 %v528
      %v693 = vpop.f32.mrf.mxu0
      %v694 = vadd.f32 %v570, %v693
      %v695 = vpop.f32.mrf.mxu0
      %696 = vmatprep.mubr.f32.mxu0 0.0
      %697 = vmatmul.mubr.f32.gmra.mxu0 %v529
      %v698 = vpop.f32.mrf.mxu0
      %v699 = vadd.f32 %v570, %v698
      %v700 = vpop.f32.mrf.mxu0
      %701 = vmatprep.mubr.f32.mxu0 0.0
      %702 = vmatmul.mubr.f32.gmra.mxu0 %v530
      %v703 = vpop.f32.mrf.mxu0
      %v704 = vadd.f32 %v570, %v703
      %v705 = vpop.f32.mrf.mxu0
      %706 = vmatprep.mubr.f32.mxu0 0.0
      %707 = vmatmul.mubr.f32.gmra.mxu0 %v531
      %v708 = vpop.f32.mrf.mxu0
      %v709 = vadd.f32 %v570, %v708
      %v710 = vpop.f32.mrf.mxu0
      %711 = vmatprep.mubr.f32.mxu0 0.0
      %712 = vmatmul.mubr.f32.gmra.mxu0 %v532
      %v713 = vpop.f32.mrf.mxu0
      %v714 = vadd.f32 %v570, %v713
      %v715 = vpop.f32.mrf.mxu0
      %716 = vdwg.mxu0
      %v717 = vsub.f32 0.0, %v639
      %v718 = vsub.f32 0.0, %v644
      %v719 = vsub.f32 0.0, %v649
      %v720 = vsub.f32 0.0, %v654
      %v721 = vsub.f32 0.0, %v659
      %v722 = vsub.f32 0.0, %v664
      %v723 = vsub.f32 0.0, %v669
      %v724 = vsub.f32 0.0, %v674
      %v725 = vsub.f32 0.0, %v679
      %v726 = vsub.f32 0.0, %v684
      %v727 = vsub.f32 0.0, %v689
      %v728 = vsub.f32 0.0, %v694
      %v729 = vsub.f32 0.0, %v699
      %v730 = vsub.f32 0.0, %v704
      %v731 = vsub.f32 0.0, %v709
      %v732 = vsub.f32 0.0, %v714
      %v733 = vmul.f32 %v717, 1.442695
      %v734 = vpow.pop %v733
      %v735 = vmul.f32 %v718, 1.442695
      %v736 = vpow.pop %v735
      %v737 = vmul.f32 %v719, 1.442695
      %v738 = vpow.pop %v737
      %v739 = vmul.f32 %v720, 1.442695
      %v740 = vpow.pop %v739
      %v741 = vmul.f32 %v721, 1.442695
      %v742 = vpow.pop %v741
      %v743 = vmul.f32 %v722, 1.442695
      %v744 = vpow.pop %v743
      %v745 = vmul.f32 %v723, 1.442695
      %v746 = vpow.pop %v745
      %v747 = vmul.f32 %v724, 1.442695
      %v748 = vpow.pop %v747
      %v749 = vmul.f32 %v725, 1.442695
      %v750 = vpow.pop %v749
      %v751 = vmul.f32 %v726, 1.442695
      %v752 = vpow.pop %v751
      %v753 = vmul.f32 %v727, 1.442695
      %v754 = vpow.pop %v753
      %v755 = vmul.f32 %v728, 1.442695
      %v756 = vpow.pop %v755
      %v757 = vmul.f32 %v729, 1.442695
      %v758 = vpow.pop %v757
      %v759 = vmul.f32 %v730, 1.442695
      %v760 = vpow.pop %v759
      %v761 = vmul.f32 %v731, 1.442695
      %v762 = vpow.pop %v761
      %v763 = vmul.f32 %v732, 1.442695
      %v764 = vpow.pop %v763
      %v765 = vadd.f32 %v734, 1.0
      %v766 = vadd.f32 %v736, 1.0
      %v767 = vadd.f32 %v738, 1.0
      %v768 = vadd.f32 %v740, 1.0
      %v769 = vadd.f32 %v742, 1.0
      %v770 = vadd.f32 %v744, 1.0
      %v771 = vadd.f32 %v746, 1.0
      %v772 = vadd.f32 %v748, 1.0
      %v773 = vadd.f32 %v750, 1.0
      %v774 = vadd.f32 %v752, 1.0
      %v775 = vadd.f32 %v754, 1.0
      %v776 = vadd.f32 %v756, 1.0
      %v777 = vadd.f32 %v758, 1.0
      %v778 = vadd.f32 %v760, 1.0
      %v779 = vadd.f32 %v762, 1.0
      %v780 = vadd.f32 %v764, 1.0
      %v781 = vrcp.pop %v765
      %v782 = vrcp.pop %v766
      %v783 = vrcp.pop %v767
      %v784 = vrcp.pop %v768
      %v785 = vrcp.pop %v769
      %v786 = vrcp.pop %v770
      %v787 = vrcp.pop %v771
      %v788 = vrcp.pop %v772
      %v789 = vrcp.pop %v773
      %v790 = vrcp.pop %v774
      %v791 = vrcp.pop %v775
      %v792 = vrcp.pop %v776
      %v793 = vrcp.pop %v777
      %v794 = vrcp.pop %v778
      %v795 = vrcp.pop %v779
      %v796 = vrcp.pop %v780
      %797 = vst [vmem:[%s261] sm:$0xff] %v781
      %798 = vst [vmem:[%s261 + $0x8] sm:$0xff] %v782
      %799 = vst [vmem:[%s261 + $0x10] sm:$0xff] %v783
      %800 = vst [vmem:[%s261 + $0x18] sm:$0xff] %v784
      %801 = vst [vmem:[%s261 + $0x20] sm:$0xff] %v785
      %802 = vst [vmem:[%s261 + $0x28] sm:$0xff] %v786
      %803 = vst [vmem:[%s261 + $0x30] sm:$0xff] %v787
      %804 = vst [vmem:[%s261 + $0x38] sm:$0xff] %v788
      %805 = vst [vmem:[%s261 + $0x40] sm:$0xff] %v789
      %806 = vst [vmem:[%s261 + $0x48] sm:$0xff] %v790
      %807 = vst [vmem:[%s261 + $0x50] sm:$0xff] %v791
      %808 = vst [vmem:[%s261 + $0x58] sm:$0xff] %v792
      %809 = vst [vmem:[%s261 + $0x60] sm:$0xff] %v793
      %810 = vst [vmem:[%s261 + $0x68] sm:$0xff] %v794
      %811 = vst [vmem:[%s261 + $0x70] sm:$0xff] %v795
      %812 = vst [vmem:[%s261 + $0x78] sm:$0xff] %v796
      %s813 = smul.u32 16, %s18
      %p814 = scmp.lt.s32.totalorder %s813, 47
      %s815 = scalar_select %p814, %s813, 47
      %s816 = smul.addr %s815, 8
      %s817 = scalar_lea.vmem %s5, %s816
      %s818 = smul.u32 16, %s18
      %p819 = scmp.lt.s32.totalorder %s818, 47
      %s820 = scalar_select %p819, %s818, 47
      %s821 = smul.addr %s820, 8
      %s822 = scalar_lea.vmem %s6, %s821
      // Predicated region
      $region41: #{_autoencoder_forward_impl.1} parent=39 // pred_check
        %p823 = pneg %p146
      $region42: #{_autoencoder_forward_impl.1} parent=39 // pred_check_branch
        %825 = sbr.rel (%p823) target = $region44
      $region43: #{_autoencoder_forward_impl.1} parent=39 // pred_region
        %s826 = smul.u32 16, %s18
      $region44: #{_autoencoder_forward_impl.1} parent=39 // pred_fallthru
        _
      // Predicated region
      $region45: #{_autoencoder_forward_impl.1} parent=39 // pred_check
        %p827 = pneg %p172
      $region46: #{_autoencoder_forward_impl.1} parent=39 // pred_check_branch
        %829 = sbr.rel (%p827) target = $region48
      $region47: #{_autoencoder_forward_impl.1} parent=39 // pred_region
        %s830 = smul.u32 16, %s18
      $region48: #{_autoencoder_forward_impl.1} parent=39 // pred_fallthru
        _
    $region40: #{_autoencoder_forward_impl.1} parent=5 // pred_fallthru
      _
    %p831 = scmp.le.s32.totalorder 2, %s13
    // Predicated region
    $region49: #{_autoencoder_forward_impl.1} parent=5 // pred_check
      %p832 = pneg %p831
    $region50: #{_autoencoder_forward_impl.1} parent=5 // pred_check_branch
      %834 = sbr.rel (%p832) target = $region52
    $region51: #{_autoencoder_forward_impl.1} parent=5 // pred_region
      %s835 = ssub.s32 %s13, 2
      // Predicated region
      $region53: #{_autoencoder_forward_impl.1} parent=51 // pred_check
        %p836 = pneg %p152
      $region54: #{_autoencoder_forward_impl.1} parent=51 // pred_check_branch
        %838 = sbr.rel (%p836) target = $region56
      $region55: #{_autoencoder_forward_impl.1} parent=51 // pred_region
        %s839 = smul.u32 16, %s19
        %p840 = scmp.lt.s32.totalorder %s839, 47
        %s841 = scalar_select %p840, %s839, 47
        %s842 = smul.addr %s841, 8
        %s843 = scalar_lea.vmem %s5, %s842
      $region56: #{_autoencoder_forward_impl.1} parent=51 // pred_fallthru
        _
      // Predicated region
      $region57: #{_autoencoder_forward_impl.1} parent=51 // pred_check
        %p844 = pneg %p178
      $region58: #{_autoencoder_forward_impl.1} parent=51 // pred_check_branch
        %846 = sbr.rel (%p844) target = $region60
      $region59: #{_autoencoder_forward_impl.1} parent=51 // pred_region
        %s847 = smul.u32 16, %s19
        %p848 = scmp.lt.s32.totalorder %s847, 47
        %s849 = scalar_select %p848, %s847, 47
        %s850 = smul.addr %s849, 8
        %s851 = scalar_lea.vmem %s6, %s850
      $region60: #{_autoencoder_forward_impl.1} parent=51 // pred_fallthru
        _
    $region52: #{_autoencoder_forward_impl.1} parent=5 // pred_fallthru
      _
  $region6: #{_autoencoder_forward_impl.1} parent=0 // loop_footer
    %s17 = sadd.s32 1, %s13
  $region7: #{_autoencoder_forward_impl.1} parent=0 // loop_footer_branch
    %12 = sbr.rel target = $region3
  $region8: #{_autoencoder_forward_impl.1} parent=0 // loop_exit
    _

</llo_original>
